<compile_context>
chip_gen: v7x
topology: tpu7x:2x2x1
jax: 0.10.0
libtpu: 0.0.40
codegen_flags: <defaults>
</compile_context>

<pallas_src>
import functools

import numpy as np
import jax
import jax.numpy as jnp
from jax.experimental import pallas as pl
from jax.experimental.pallas import tpu as pltpu


def _round_up(x: int, m: int) -> int:
    return -(-x // m) * m


@functools.lru_cache(maxsize=None)
def _synthesis_weights(w: int, G: int):
    """Constant bf16 synthesis matrices, shape (4, G*w, G*4w).

    Plane p's matrix scatters coefficient column (g, j) into the four output columns of
    lane-group g:
        g*4w + 2j, g*4w + 2j+1        -> y[2i, 2j],   y[2i, 2j+1]
        g*4w + 2w + 2j, ... + 1       -> y[2i+1, 2j], y[2i+1, 2j+1]
    with the Haar signs and the 0.5 scale folded in (+-0.5 is exact in bf16)."""
    Kd, Nd = G * w, 4 * G * w
    sign = 0.5 * np.array([[1,  1,  1,  1],    # cA
                           [1,  1, -1, -1],    # cH
                           [1, -1,  1, -1],    # cV
                           [1, -1, -1,  1]],   # cD
                          dtype=np.float32)
    W = np.zeros((4, Kd, Nd), dtype=np.float32)
    g = np.arange(G)[:, None]
    j = np.arange(w)[None, :]
    rows = (g * w + j).ravel()
    c_te = (g * 4 * w + 2 * j).ravel()          # top, even column
    c_to = c_te + 1                             # top, odd column
    c_be = (g * 4 * w + 2 * w + 2 * j).ravel()  # bottom, even column
    c_bo = c_be + 1                             # bottom, odd column
    for p in range(4):
        for t, cols in enumerate((c_te, c_to, c_be, c_bo)):
            W[p, rows, cols] = sign[p, t]
    return jnp.asarray(W, dtype=jnp.bfloat16)


def _idwt_haar_kernel(x_ref, w_ref, o_ref, *, exact_split: bool):
    """x_ref: (4, TR, G*w)   lane-folded coefficient planes (cA, cH, cV, cD)
       w_ref: (4, G*w, G*4w) constant synthesis matrices (bf16, resident)
       o_ref: (TR, G*4w)     lane-folded output rows -- one full-width store."""
    acc = None
    for p in range(4):
        wp = w_ref[p]
        xp = x_ref[p]
        if exact_split:
            # f32 data on the bf16 MXU: 3 exact bf16 terms; products against +-0.5 are
            # exact and accumulation is f32 -> matches the f32 reference to ~1 ulp.
            xf = xp.astype(jnp.float32)
            x1 = xf.astype(jnp.bfloat16)
            r1 = xf - x1.astype(jnp.float32)
            x2 = r1.astype(jnp.bfloat16)
            x3 = (r1 - x2.astype(jnp.float32)).astype(jnp.bfloat16)
            terms = (x1, x2, x3)
        else:
            # bf16 input: a single matmul term is already exact.
            terms = (xp.astype(jnp.bfloat16),)
        for t in terms:
            d = jnp.dot(t, wp, preferred_element_type=jnp.float32)
            acc = d if acc is None else acc + d
    o_ref[...] = acc.astype(o_ref.dtype)


def _choose_fold(R: int, w: int) -> int:
    """Lane-fold factor G (must divide R so the reshapes stay free views):
    smallest G making the output row G*4w a multiple of 128 lanes (preferably >= 512),
    while keeping the MXU contraction dim G*w <= 256."""
    if (4 * w) % 128 == 0 and 4 * w >= 512:
        return 1
    divs = [g for g in range(1, min(R, 512) + 1) if R % g == 0 and g * w <= 256]
    lane_ok = [g for g in divs if (g * 4 * w) % 128 == 0]
    if not lane_ok:
        return 1          # fallback: correctness path (masked stores), e.g. odd row counts
    wide = [g for g in lane_ok if g * 4 * w >= 512]
    return min(wide) if wide else min(lane_ok)


def _device_config():
    """(per-step block budget, vmem limit, min grid blocks) by TPU generation."""
    kind = ""
    try:
        kind = jax.devices()[0].device_kind.lower()
    except Exception:
        pass
    if "v5" in kind or "v6" in kind:
        # single TensorCore, 128 MiB physical VMEM: big blocks, no forced grid split
        return 14 * 1024 * 1024, 64 * 1024 * 1024, 1
    # v7x / unknown: 64 MiB VMEM, 2 TensorCores -> smaller blocks, >= 4 balanced blocks
    return 6 * 1024 * 1024, 32 * 1024 * 1024, 4


def _choose_rows(Rf, Kd, Nd, in_item, out_item, sub, budget, min_blocks):
    """Folded rows per grid step: biggest block inside `budget` of double-buffered
    (lane-padded) in+out traffic, rounded to the input dtype's sublane packing,
    optionally capped so the grid has >= min_blocks steps for megacore balance."""
    kpad = _round_up(Kd, 128)
    npad = _round_up(Nd, 128)
    per_row = 2 * (4 * kpad * in_item + npad * out_item)
    tr = int(budget // per_row)
    if min_blocks > 1:
        tr = min(tr, -(-Rf // min_blocks))
    if tr >= Rf:
        return Rf
    tr = max(sub, (tr // sub) * sub)
    return int(min(tr, Rf))


def idwt_haar(x: jax.Array, out_dtype=jnp.float32) -> jax.Array:
    """x: (4, B, C, h, w) stacked (cA, cH, cV, cD), any float dtype.
    Returns (B, C, 2h, 2w) in `out_dtype` (default float32), matching
    pywt.idwt2(..., 'haar').  Pass bfloat16 to halve the HBM write traffic."""
    assert x.ndim == 5 and x.shape[0] == 4, "expected stacked (cA, cH, cV, cD)"
    _, B, C, h, w = x.shape
    R = B * C * h
    G = _choose_fold(R, w)
    Rf, Kd, Nd = R // G, G * w, 4 * G * w

    x3 = x.reshape(4, Rf, Kd)                   # free contiguous view
    weights = _synthesis_weights(w, G)          # (4, Kd, Nd) bf16, cached & resident

    in_item = x3.dtype.itemsize
    out_item = np.dtype(out_dtype).itemsize
    sub = {4: 8, 2: 16, 1: 32}.get(in_item, 8)
    budget, vmem_limit, min_blocks = _device_config()
    tr = _choose_rows(Rf, Kd, Nd, in_item, out_item, sub, budget, min_blocks)
    grid = (pl.cdiv(Rf, tr),)

    kernel = functools.partial(_idwt_haar_kernel,
                               exact_split=(x3.dtype != jnp.bfloat16))
    out2d = pl.pallas_call(
        kernel,
        out_shape=jax.ShapeDtypeStruct((Rf, Nd), out_dtype),
        grid=grid,
        in_specs=[pl.BlockSpec((4, tr, Kd), lambda i: (0, i, 0)),
                  pl.BlockSpec((4, Kd, Nd), lambda i: (0, 0, 0))],
        out_specs=pl.BlockSpec((tr, Nd), lambda i: (i, 0)),
        compiler_params=pltpu.CompilerParams(
            dimension_semantics=("parallel",),
            vmem_limit_bytes=vmem_limit),
    )(x3, weights)

    # Row rf, lane-group g of (Rf, G*4w) holds [ y[2i, :] | y[2i+1, :] ] for coefficient
    # row r = rf*G + g, which is exactly the row-major layout of (B, C, 2h, 2w):
    # free contiguous reshape, no extra HBM pass.
    return out2d.reshape(B, C, 2 * h, 2 * w)


def _idwt_haar_reference(x: np.ndarray) -> np.ndarray:
    """Independent numpy reference (matches pywt.idwt2 'haar')."""
    cA, cH, cV, cD = [np.asarray(c, dtype=np.float64) for c in x]
    pa = np.array([[1.0, 1.0], [1.0, 1.0]])
    ph = np.array([[1.0, 1.0], [-1.0, -1.0]])
    pv = np.array([[1.0, -1.0], [1.0, -1.0]])
    pd = np.array([[1.0, -1.0], [-1.0, 1.0]])
    B, C, h, w = cA.shape
    out = np.zeros((B, C, 2 * h, 2 * w), dtype=np.float64)
    for b in range(B):
        for c in range(C):
            out[b, c] = 0.5 * (np.kron(cA[b, c], pa) + np.kron(cH[b, c], ph)
                               + np.kron(cV[b, c], pv) + np.kron(cD[b, c], pd))
    return out.astype(np.float32)


if __name__ == "__main__":
    # Main check: B=2, C=4, 16x16 coefficient planes -> (2, 4, 32, 32) output.
    # Exercises the lane-folded path (G=8: 128-lane input rows, 512-lane output rows).
    B, C, h, w = 2, 4, 16, 16
    x = jax.random.normal(jax.random.PRNGKey(0), (4, B, C, h, w), dtype=jnp.float32)
    y = jax.block_until_ready(idwt_haar(x))
    assert y.shape == (B, C, 2 * h, 2 * w)
    np.testing.assert_allclose(np.asarray(y), _idwt_haar_reference(np.asarray(x)),
                               rtol=1e-5, atol=1e-5)

    # Ragged / fallback check: R = B*C*h = 90 has no valid fold factor, so G=1 and the
    # last grid block is partial -> exercises the masked-writeback correctness path.
    B2, C2, h2, w2 = 3, 5, 6, 8
    x_r = jax.random.normal(jax.random.PRNGKey(1), (4, B2, C2, h2, w2),
                            dtype=jnp.float32)
    y_r = jax.block_until_ready(idwt_haar(x_r))
    assert y_r.shape == (B2, C2, 2 * h2, 2 * w2)
    np.testing.assert_allclose(np.asarray(y_r), _idwt_haar_reference(np.asarray(x_r)),
                               rtol=1e-5, atol=1e-5)

    # bf16-input check: exercises the single-matmul (no exact-split) path.
    x_bf = x.astype(jnp.bfloat16)
    y_bf = jax.block_until_ready(idwt_haar(x_bf))
    ref_bf = _idwt_haar_reference(np.asarray(x_bf.astype(jnp.float32)))
    np.testing.assert_allclose(np.asarray(y_bf), ref_bf, rtol=1e-5, atol=1e-5)

    print("KERNEL_OK")
</pallas_src>

<mosaic_0001>
module attributes {stable_mosaic.version = 11 : i64} {
  func.func @_idwt_haar_kernel(%arg0: i32, %arg1: memref<4x8x128xf32, #tpu.memory_space<vmem>>, %arg2: memref<4x128x512xbf16, #tpu.memory_space<vmem>>, %arg3: memref<8x512xf32, #tpu.memory_space<vmem>>) attributes {dimension_semantics = [#tpu.dimension_semantics<parallel>], iteration_bounds = array<i64: 2>, scalar_prefetch = 0 : i64, scratch_operands = 0 : i64, tpu.core_type = #tpu.core_type<tc>, window_params = [{transform_indices = @transform_0, window_bounds = array<i64: 4, 8, 128>}, {pipeline_mode = #tpu.pipeline_mode<synchronous>, transform_indices = @transform_1, window_bounds = array<i64: 4, 128, 512>}, {transform_indices = @transform_2, window_bounds = array<i64: 8, 512>}]} {
    %c0 = arith.constant 0 : index
    %c0_0 = arith.constant 0 : index
    %c0_1 = arith.constant 0 : index
    %0 = vector.load %arg2[%c0, %c0_0, %c0_1] : memref<4x128x512xbf16, #tpu.memory_space<vmem>>, vector<1x128x512xbf16>
    %1 = vector.shape_cast %0 : vector<1x128x512xbf16> to vector<128x512xbf16>
    %c0_2 = arith.constant 0 : index
    %c0_3 = arith.constant 0 : index
    %c0_4 = arith.constant 0 : index
    %2 = vector.load %arg1[%c0_2, %c0_3, %c0_4] : memref<4x8x128xf32, #tpu.memory_space<vmem>>, vector<1x8x128xf32>
    %3 = vector.shape_cast %2 : vector<1x8x128xf32> to vector<8x128xf32>
    %4 = arith.truncf %3 : vector<8x128xf32> to vector<8x128xbf16>
    %5 = arith.extf %4 : vector<8x128xbf16> to vector<8x128xf32>
    %6 = arith.subf %3, %5 : vector<8x128xf32>
    %7 = arith.truncf %6 : vector<8x128xf32> to vector<8x128xbf16>
    %8 = arith.extf %7 : vector<8x128xbf16> to vector<8x128xf32>
    %9 = arith.subf %6, %8 : vector<8x128xf32>
    %10 = arith.truncf %9 : vector<8x128xf32> to vector<8x128xbf16>
    %cst = arith.constant dense<0.000000e+00> : vector<8x512xf32>
    %11 = tpu.matmul %4, %1, %cst {dimension_numbers = #tpu.dot_dimension_numbers<[1], [0], [0], [1], [0, 0, 1, 1], [], []>} : vector<8x128xbf16>, vector<128x512xbf16>, vector<8x512xf32> -> vector<8x512xf32>
    %cst_5 = arith.constant dense<0.000000e+00> : vector<8x512xf32>
    %12 = tpu.matmul %7, %1, %cst_5 {dimension_numbers = #tpu.dot_dimension_numbers<[1], [0], [0], [1], [0, 0, 1, 1], [], []>} : vector<8x128xbf16>, vector<128x512xbf16>, vector<8x512xf32> -> vector<8x512xf32>
    %13 = arith.addf %11, %12 : vector<8x512xf32>
    %cst_6 = arith.constant dense<0.000000e+00> : vector<8x512xf32>
    %14 = tpu.matmul %10, %1, %cst_6 {dimension_numbers = #tpu.dot_dimension_numbers<[1], [0], [0], [1], [0, 0, 1, 1], [], []>} : vector<8x128xbf16>, vector<128x512xbf16>, vector<8x512xf32> -> vector<8x512xf32>
    %15 = arith.addf %13, %14 : vector<8x512xf32>
    %c1 = arith.constant 1 : index
    %c0_7 = arith.constant 0 : index
    %c0_8 = arith.constant 0 : index
    %16 = vector.load %arg2[%c1, %c0_7, %c0_8] : memref<4x128x512xbf16, #tpu.memory_space<vmem>>, vector<1x128x512xbf16>
    %17 = vector.shape_cast %16 : vector<1x128x512xbf16> to vector<128x512xbf16>
    %c1_9 = arith.constant 1 : index
    %c0_10 = arith.constant 0 : index
    %c0_11 = arith.constant 0 : index
    %18 = vector.load %arg1[%c1_9, %c0_10, %c0_11] : memref<4x8x128xf32, #tpu.memory_space<vmem>>, vector<1x8x128xf32>
    %19 = vector.shape_cast %18 : vector<1x8x128xf32> to vector<8x128xf32>
    %20 = arith.truncf %19 : vector<8x128xf32> to vector<8x128xbf16>
    %21 = arith.extf %20 : vector<8x128xbf16> to vector<8x128xf32>
    %22 = arith.subf %19, %21 : vector<8x128xf32>
    %23 = arith.truncf %22 : vector<8x128xf32> to vector<8x128xbf16>
    %24 = arith.extf %23 : vector<8x128xbf16> to vector<8x128xf32>
    %25 = arith.subf %22, %24 : vector<8x128xf32>
    %26 = arith.truncf %25 : vector<8x128xf32> to vector<8x128xbf16>
    %cst_12 = arith.constant dense<0.000000e+00> : vector<8x512xf32>
    %27 = tpu.matmul %20, %17, %cst_12 {dimension_numbers = #tpu.dot_dimension_numbers<[1], [0], [0], [1], [0, 0, 1, 1], [], []>} : vector<8x128xbf16>, vector<128x512xbf16>, vector<8x512xf32> -> vector<8x512xf32>
    %28 = arith.addf %15, %27 : vector<8x512xf32>
    %cst_13 = arith.constant dense<0.000000e+00> : vector<8x512xf32>
    %29 = tpu.matmul %23, %17, %cst_13 {dimension_numbers = #tpu.dot_dimension_numbers<[1], [0], [0], [1], [0, 0, 1, 1], [], []>} : vector<8x128xbf16>, vector<128x512xbf16>, vector<8x512xf32> -> vector<8x512xf32>
    %30 = arith.addf %28, %29 : vector<8x512xf32>
    %cst_14 = arith.constant dense<0.000000e+00> : vector<8x512xf32>
    %31 = tpu.matmul %26, %17, %cst_14 {dimension_numbers = #tpu.dot_dimension_numbers<[1], [0], [0], [1], [0, 0, 1, 1], [], []>} : vector<8x128xbf16>, vector<128x512xbf16>, vector<8x512xf32> -> vector<8x512xf32>
    %32 = arith.addf %30, %31 : vector<8x512xf32>
    %c2 = arith.constant 2 : index
    %c0_15 = arith.constant 0 : index
    %c0_16 = arith.constant 0 : index
    %33 = vector.load %arg2[%c2, %c0_15, %c0_16] : memref<4x128x512xbf16, #tpu.memory_space<vmem>>, vector<1x128x512xbf16>
    %34 = vector.shape_cast %33 : vector<1x128x512xbf16> to vector<128x512xbf16>
    %c2_17 = arith.constant 2 : index
    %c0_18 = arith.constant 0 : index
    %c0_19 = arith.constant 0 : index
    %35 = vector.load %arg1[%c2_17, %c0_18, %c0_19] : memref<4x8x128xf32, #tpu.memory_space<vmem>>, vector<1x8x128xf32>
    %36 = vector.shape_cast %35 : vector<1x8x128xf32> to vector<8x128xf32>
    %37 = arith.truncf %36 : vector<8x128xf32> to vector<8x128xbf16>
    %38 = arith.extf %37 : vector<8x128xbf16> to vector<8x128xf32>
    %39 = arith.subf %36, %38 : vector<8x128xf32>
    %40 = arith.truncf %39 : vector<8x128xf32> to vector<8x128xbf16>
    %41 = arith.extf %40 : vector<8x128xbf16> to vector<8x128xf32>
    %42 = arith.subf %39, %41 : vector<8x128xf32>
    %43 = arith.truncf %42 : vector<8x128xf32> to vector<8x128xbf16>
    %cst_20 = arith.constant dense<0.000000e+00> : vector<8x512xf32>
    %44 = tpu.matmul %37, %34, %cst_20 {dimension_numbers = #tpu.dot_dimension_numbers<[1], [0], [0], [1], [0, 0, 1, 1], [], []>} : vector<8x128xbf16>, vector<128x512xbf16>, vector<8x512xf32> -> vector<8x512xf32>
    %45 = arith.addf %32, %44 : vector<8x512xf32>
    %cst_21 = arith.constant dense<0.000000e+00> : vector<8x512xf32>
    %46 = tpu.matmul %40, %34, %cst_21 {dimension_numbers = #tpu.dot_dimension_numbers<[1], [0], [0], [1], [0, 0, 1, 1], [], []>} : vector<8x128xbf16>, vector<128x512xbf16>, vector<8x512xf32> -> vector<8x512xf32>
    %47 = arith.addf %45, %46 : vector<8x512xf32>
    %cst_22 = arith.constant dense<0.000000e+00> : vector<8x512xf32>
    %48 = tpu.matmul %43, %34, %cst_22 {dimension_numbers = #tpu.dot_dimension_numbers<[1], [0], [0], [1], [0, 0, 1, 1], [], []>} : vector<8x128xbf16>, vector<128x512xbf16>, vector<8x512xf32> -> vector<8x512xf32>
    %49 = arith.addf %47, %48 : vector<8x512xf32>
    %c3 = arith.constant 3 : index
    %c0_23 = arith.constant 0 : index
    %c0_24 = arith.constant 0 : index
    %50 = vector.load %arg2[%c3, %c0_23, %c0_24] : memref<4x128x512xbf16, #tpu.memory_space<vmem>>, vector<1x128x512xbf16>
    %51 = vector.shape_cast %50 : vector<1x128x512xbf16> to vector<128x512xbf16>
    %c3_25 = arith.constant 3 : index
    %c0_26 = arith.constant 0 : index
    %c0_27 = arith.constant 0 : index
    %52 = vector.load %arg1[%c3_25, %c0_26, %c0_27] : memref<4x8x128xf32, #tpu.memory_space<vmem>>, vector<1x8x128xf32>
    %53 = vector.shape_cast %52 : vector<1x8x128xf32> to vector<8x128xf32>
    %54 = arith.truncf %53 : vector<8x128xf32> to vector<8x128xbf16>
    %55 = arith.extf %54 : vector<8x128xbf16> to vector<8x128xf32>
    %56 = arith.subf %53, %55 : vector<8x128xf32>
    %57 = arith.truncf %56 : vector<8x128xf32> to vector<8x128xbf16>
    %58 = arith.extf %57 : vector<8x128xbf16> to vector<8x128xf32>
    %59 = arith.subf %56, %58 : vector<8x128xf32>
    %60 = arith.truncf %59 : vector<8x128xf32> to vector<8x128xbf16>
    %cst_28 = arith.constant dense<0.000000e+00> : vector<8x512xf32>
    %61 = tpu.matmul %54, %51, %cst_28 {dimension_numbers = #tpu.dot_dimension_numbers<[1], [0], [0], [1], [0, 0, 1, 1], [], []>} : vector<8x128xbf16>, vector<128x512xbf16>, vector<8x512xf32> -> vector<8x512xf32>
    %62 = arith.addf %49, %61 : vector<8x512xf32>
    %cst_29 = arith.constant dense<0.000000e+00> : vector<8x512xf32>
    %63 = tpu.matmul %57, %51, %cst_29 {dimension_numbers = #tpu.dot_dimension_numbers<[1], [0], [0], [1], [0, 0, 1, 1], [], []>} : vector<8x128xbf16>, vector<128x512xbf16>, vector<8x512xf32> -> vector<8x512xf32>
    %64 = arith.addf %62, %63 : vector<8x512xf32>
    %cst_30 = arith.constant dense<0.000000e+00> : vector<8x512xf32>
    %65 = tpu.matmul %60, %51, %cst_30 {dimension_numbers = #tpu.dot_dimension_numbers<[1], [0], [0], [1], [0, 0, 1, 1], [], []>} : vector<8x128xbf16>, vector<128x512xbf16>, vector<8x512xf32> -> vector<8x512xf32>
    %66 = arith.addf %64, %65 : vector<8x512xf32>
    %c0_31 = arith.constant 0 : index
    %c0_32 = arith.constant 0 : index
    %67 = vector.load %arg3[%c0_31, %c0_32] : memref<8x512xf32, #tpu.memory_space<vmem>>, vector<8x512xf32>
    tpu.vector_store %arg3[%c0_31, %c0_32], %66 {strides = array<i32>} : memref<8x512xf32, #tpu.memory_space<vmem>>, vector<8x512xf32>,
    return
  }
  func.func @transform_0(%arg0: i32) -> (i32, i32, i32) {
    %c0_i32 = arith.constant 0 : i32
    %c0_i32_0 = arith.constant 0 : i32
    %c0_i32_1 = arith.constant 0 : i32
    return %c0_i32, %arg0, %c0_i32_0 : i32, i32, i32
  }
  func.func @transform_1(%arg0: i32) -> (i32, i32, i32) {
    %c0_i32 = arith.constant 0 : i32
    %c0_i32_0 = arith.constant 0 : i32
    %c0_i32_1 = arith.constant 0 : i32
    %c0_i32_2 = arith.constant 0 : i32
    return %c0_i32, %c0_i32_0, %c0_i32_1 : i32, i32, i32
  }
  func.func @transform_2(%arg0: i32) -> (i32, i32) {
    %c0_i32 = arith.constant 0 : i32
    %c0_i32_0 = arith.constant 0 : i32
    return %arg0, %c0_i32 : i32, i32
  }
}

</mosaic_0001>

<llo_original>
// kernel: tpu_custom_call.1
$region0: #{tpu_custom_call.1}
  #allocation0 [shape = 'u32[]', space=smem, size = 0x4, offset = 0x4, fixed_abs, tag = 'smem constant byte address 0x4 - core index']
  #allocation1 [shape = 'u32[144,128]{1,0:T(1,128)}', space=vmem, size = 0x12000, scoped, tag = 'internal scratch']
  %s0 = inlined_call_operand.hbm [shape: f32[4,16,128], index: 0, kind: input, shape index: {}]
  %s1 = inlined_call_operand.hbm [shape: bf16[4,128,512], index: 1, kind: input, shape index: {}]
  %s2 = inlined_call_operand.hbm [shape: f32[16,512], index: 2, kind: output, shape index: {}]
  %s3 = sld [smem:[#allocation0]]
  $region49: #{tpu_custom_call.1} parent=0
    _
  %s5 = ssub.s32 1, %s3
  %s6 = scalar_select 0, %s5, %s3
  $region1: #{tpu_custom_call.1} parent=0
    #allocation2 [shape = 'u8[32768]{0}', space=vmem, size = 0x8000, scoped, tag = 'input window, operand 0']
    #allocation3 [shape = 's32[2]{0}', space=sflag, size = 0x8, scoped, tag = 'scoped memory for tpu_custom_call.1']
    #allocation4 [shape = 's32[2]{0}', space=sflag, size = 0x8, scoped, tag = 'scoped memory for tpu_custom_call.1']
    #allocation5 [shape = 'u8[524288]{0}', space=vmem, size = 0x80000, scoped, tag = 'input window, operand 1, single buffered']
    #allocation6 [shape = 's32[1]{0}', space=sflag, size = 0x4, scoped, tag = 'scoped memory for tpu_custom_call.1']
    #allocation7 [shape = 'u8[32768]{0}', space=vmem, size = 0x8000, scoped, tag = 'output window, operand 0']
    %7 = vsyncpa [#allocation3], 0
    %s8 = scalar_lea.sflag [#allocation3], 1
    %9 = vsyncpa %s8, 0
    %10 = vsyncpa [#allocation6], 0
    %11 = vsyncpa [#allocation4], 0
    %s12 = scalar_lea.sflag [#allocation4], 1
    %13 = vsyncpa %s12, 0
    loop: start=0, step=1, limit=4
    $region2: #{tpu_custom_call.1} parent=1 // loop_pre_header
      _
    $region3: #{tpu_custom_call.1} parent=1 // loop_header
      %s15 = sphi 0, %s19
      %p16 = scmp.ge.s32.totalorder %s15, 4
      %s25 = sphi 0, %s27
      %s28 = sphi 0, %s25
      %s29 = sphi 0, %s28
      %s45 = sphi 0, %s29
      %s49 = sphi 0, %s49
      %s51 = sphi 0, %s49
      %s52 = sphi 0, %s51
      %s66 = sphi 0, %s52
      %s72 = sphi 0, %s74
      %s75 = sphi 0, %s72
      %s76 = sphi 0, %s75
      %s92 = sphi 0, %s76
    $region4: #{tpu_custom_call.1} parent=1 // loop_header_branch
      %18 = sbr.rel (%p16) target = $region8
    $region5: #{tpu_custom_call.1} parent=1 // loop_body
      %s20 = ssub.s32 %s15, 1
      %s21 = ssub.s32 %s15, 2
      %s22 = sadd.s32 %s15, 1
      %s23 = ssub.s32 %s15, %s22
      %p24 = scmp.eq.s32.totalorder %s23, 0
      %s26 = sadd.s32 %s25, 1
      %s27 = scalar_select %p24, %s25, %s26
      %p30 = pneg %p24
      %p31 = scmp.eq.s32.totalorder %s15, 1
      %p32 = por %p30, %p31
      %p33 = scmp.ne.s32.totalorder %s25, %s28
      %p34 = scmp.eq.s32.totalorder %s15, 0
      %p35 = por %p33, %p34
      %p36 = scmp.ne.s32.totalorder %s25, %s28
      %p37 = scmp.eq.s32.totalorder %s20, 1
      %p38 = por %p36, %p37
      %p39 = scmp.ne.s32.totalorder %s28, %s29
      %p40 = scmp.eq.s32.totalorder %s20, 0
      %p41 = por %p39, %p40
      %p42 = scmp.ne.s32.totalorder %s28, %s29
      %p43 = scmp.eq.s32.totalorder %s21, 1
      %p44 = por %p42, %p43
      %p46 = scmp.ne.s32.totalorder %s29, %s45
      %p47 = scmp.eq.s32.totalorder %s21, 0
      %p48 = por %p46, %p47
      %s50 = sadd.s32 %s49, 1
      %p53 = scmp.eq.s32.totalorder %s15, 1
      %p54 = scmp.ne.s32.totalorder %s49, %s51
      %p55 = scmp.eq.s32.totalorder %s15, 0
      %p56 = por %p54, %p55
      %p57 = scmp.ne.s32.totalorder %s49, %s51
      %p58 = scmp.eq.s32.totalorder %s20, 1
      %p59 = por %p57, %p58
      %p60 = scmp.ne.s32.totalorder %s51, %s52
      %p61 = scmp.eq.s32.totalorder %s20, 0
      %p62 = por %p60, %p61
      %p63 = scmp.ne.s32.totalorder %s51, %s52
      %p64 = scmp.eq.s32.totalorder %s21, 1
      %p65 = por %p63, %p64
      %p67 = scmp.ne.s32.totalorder %s52, %s66
      %p68 = scmp.eq.s32.totalorder %s21, 0
      %p69 = por %p67, %p68
      %s70 = ssub.s32 %s15, %s22
      %p71 = scmp.eq.s32.totalorder %s70, 0
      %s73 = sadd.s32 %s72, 1
      %s74 = scalar_select %p71, %s72, %s73
      %p77 = pneg %p71
      %p78 = scmp.eq.s32.totalorder %s15, 1
      %p79 = por %p77, %p78
      %p80 = scmp.ne.s32.totalorder %s72, %s75
      %p81 = scmp.eq.s32.totalorder %s15, 0
      %p82 = por %p80, %p81
      %p83 = scmp.ne.s32.totalorder %s72, %s75
      %p84 = scmp.eq.s32.totalorder %s20, 1
      %p85 = por %p83, %p84
      %p86 = scmp.ne.s32.totalorder %s75, %s76
      %p87 = scmp.eq.s32.totalorder %s20, 0
      %p88 = por %p86, %p87
      %p89 = scmp.ne.s32.totalorder %s75, %s76
      %p90 = scmp.eq.s32.totalorder %s21, 1
      %p91 = por %p89, %p90
      %p93 = scmp.ne.s32.totalorder %s76, %s92
      %p94 = scmp.eq.s32.totalorder %s21, 0
      %p95 = por %p93, %p94
      %p96 = scmp.le.s32.totalorder 1, %s15
      %p97 = scmp.lt.s32.totalorder %s15, 3
      %p98 = pnand %p96, %p97
      %p99 = pneg %p98
      // Predicated region
      $region9: #{tpu_custom_call.1} parent=5 // pred_check
        _
      $region10: #{tpu_custom_call.1} parent=5 // pred_check_branch
        %101 = sbr.rel (%p98) target = $region12
      $region11: #{tpu_custom_call.1} parent=5 // pred_region
        %s102 = ssub.s32 %s15, 1
        // Predicated region
        $region13: #{tpu_custom_call.1} parent=11 // pred_check
          %p103 = pneg %p62
        $region14: #{tpu_custom_call.1} parent=11 // pred_check_branch
          %105 = sbr.rel (%p103) target = $region16
        $region15: #{tpu_custom_call.1} parent=11 // pred_region
          %s107 = ssub.s32 16384, 16384
          %108 = vsyncadd [#allocation6], %s107
          %s109 = sshll.u32 [#allocation5], 4
          %s110 = int_to_ptr.vmem [resolvable:$true] %s109
          %115 = dma.hbm_to_vmem [thread:$0]  %s1, 16384, %s110, [#allocation6], 256, 256, 16
        $region16: #{tpu_custom_call.1} parent=11 // pred_fallthru
          _
      $region12: #{tpu_custom_call.1} parent=5 // pred_fallthru
        _
      %p116 = scmp.lt.s32.totalorder %s15, 2
      // Predicated region
      $region17: #{tpu_custom_call.1} parent=5 // pred_check
        %p117 = pneg %p116
      $region18: #{tpu_custom_call.1} parent=5 // pred_check_branch
        %119 = sbr.rel (%p117) target = $region20
      $region19: #{tpu_custom_call.1} parent=5 // pred_region
        // Predicated region
        $region21: #{tpu_custom_call.1} parent=19 // pred_check
          %p120 = pneg %p35
        $region22: #{tpu_custom_call.1} parent=19 // pred_check_branch
          %122 = sbr.rel (%p120) target = $region24
        $region23: #{tpu_custom_call.1} parent=19 // pred_region
          %s123 = sand.u32 %s25, 1
          %s124 = scalar_lea.sflag [#allocation3], %s123
          %s125 = sand.u32 %s25, 1
          %s126 = smul.addr %s125, 32
          %s127 = scalar_lea.vmem [#allocation2], %s126
          %s129 = ssub.s32 512, 512
          %130 = vsyncadd %s124, %s129
          %s131 = smul.addr %s15, 128
          %s132 = scalar_lea.hbm %s0, %s131
          %s133 = sshll.u32 %s127, 4
          %s134 = int_to_ptr.vmem [resolvable:$true] %s133
          %139 = dma.hbm_to_vmem [thread:$0]  %s132, 512, %s134, %s124, 256, 128, 8
        $region24: #{tpu_custom_call.1} parent=19 // pred_fallthru
          _
      $region20: #{tpu_custom_call.1} parent=5 // pred_fallthru
        _
      %p140 = scmp.le.s32.totalorder 1, %s15
      %p141 = scmp.lt.s32.totalorder %s15, 3
      %p142 = pnand %p140, %p141
      %p143 = pneg %p142
      // Predicated region
      $region25: #{tpu_custom_call.1} parent=5 // pred_check
        _
      $region26: #{tpu_custom_call.1} parent=5 // pred_check_branch
        %145 = sbr.rel (%p142) target = $region28
      $region27: #{tpu_custom_call.1} parent=5 // pred_region
        %s146 = ssub.s32 %s15, 1
        %s147 = sand.u32 %s28, 1
        %s148 = scalar_lea.sflag [#allocation3], %s147
        %s149 = sand.u32 %s28, 1
        %s150 = smul.addr %s149, 32
        %s151 = scalar_lea.vmem [#allocation2], %s150
        // Predicated region
        $region29: #{tpu_custom_call.1} parent=27 // pred_check
          %p152 = pneg %p41
        $region30: #{tpu_custom_call.1} parent=27 // pred_check_branch
          %154 = sbr.rel (%p152) target = $region32
        $region31: #{tpu_custom_call.1} parent=27 // pred_region
          %155 = dma.done %s148, 512
        $region32: #{tpu_custom_call.1} parent=27 // pred_fallthru
          _
        // Predicated region
        $region33: #{tpu_custom_call.1} parent=27 // pred_check
          %p156 = pneg %p62
        $region34: #{tpu_custom_call.1} parent=27 // pred_check_branch
          %158 = sbr.rel (%p156) target = $region36
        $region35: #{tpu_custom_call.1} parent=27 // pred_region
          %159 = dma.done [#allocation6], 16384
        $region36: #{tpu_custom_call.1} parent=27 // pred_fallthru
          _
        %s160 = sand.u32 %s28, 1
        %s161 = scalar_lea.sflag [#allocation3], %s160
        %s162 = sand.u32 %s28, 1
        %s163 = smul.addr %s162, 32
        %s164 = scalar_lea.vmem [#allocation2], %s163
        %p165 = pneg %p41
        %p166 = pneg %p38
        %p167 = pneg %p62
        %p168 = pneg %p59
        %p169 = pneg %p88
        %p170 = pneg %p85
        %s171 = sand.u32 %s75, 1
        %s172 = scalar_lea.sflag [#allocation4], %s171
        %s173 = sand.u32 %s75, 1
        %s174 = smul.addr %s173, 32
        %s175 = scalar_lea.vmem [#allocation7], %s174
        %v177 = vld [vmem:[#allocation5] sm:$0xff]
        %v178 = vld [vmem:[#allocation5 + $0x8] sm:$0xff]
        %v179 = vld [vmem:[#allocation5 + $0x10] sm:$0xff]
        %v180 = vld [vmem:[#allocation5 + $0x18] sm:$0xff]
        %v181 = vld [vmem:[#allocation5 + $0x20] sm:$0xff]
        %v182 = vld [vmem:[#allocation5 + $0x28] sm:$0xff]
        %v183 = vld [vmem:[#allocation5 + $0x30] sm:$0xff]
        %v184 = vld [vmem:[#allocation5 + $0x38] sm:$0xff]
        %v185 = vld [vmem:[#allocation5 + $0x40] sm:$0xff]
        %v186 = vld [vmem:[#allocation5 + $0x48] sm:$0xff]
        %v187 = vld [vmem:[#allocation5 + $0x50] sm:$0xff]
        %v188 = vld [vmem:[#allocation5 + $0x58] sm:$0xff]
        %v189 = vld [vmem:[#allocation5 + $0x60] sm:$0xff]
        %v190 = vld [vmem:[#allocation5 + $0x68] sm:$0xff]
        %v191 = vld [vmem:[#allocation5 + $0x70] sm:$0xff]
        %v192 = vld [vmem:[#allocation5 + $0x78] sm:$0xff]
        %v193 = vld [vmem:[#allocation5 + $0x80] sm:$0xff]
        %v194 = vld [vmem:[#allocation5 + $0x88] sm:$0xff]
        %v195 = vld [vmem:[#allocation5 + $0x90] sm:$0xff]
        %v196 = vld [vmem:[#allocation5 + $0x98] sm:$0xff]
        %v197 = vld [vmem:[#allocation5 + $0xa0] sm:$0xff]
        %v198 = vld [vmem:[#allocation5 + $0xa8] sm:$0xff]
        %v199 = vld [vmem:[#allocation5 + $0xb0] sm:$0xff]
        %v200 = vld [vmem:[#allocation5 + $0xb8] sm:$0xff]
        %v201 = vld [vmem:[#allocation5 + $0xc0] sm:$0xff]
        %v202 = vld [vmem:[#allocation5 + $0xc8] sm:$0xff]
        %v203 = vld [vmem:[#allocation5 + $0xd0] sm:$0xff]
        %v204 = vld [vmem:[#allocation5 + $0xd8] sm:$0xff]
        %v205 = vld [vmem:[#allocation5 + $0xe0] sm:$0xff]
        %v206 = vld [vmem:[#allocation5 + $0xe8] sm:$0xff]
        %v207 = vld [vmem:[#allocation5 + $0xf0] sm:$0xff]
        %v208 = vld [vmem:[#allocation5 + $0xf8] sm:$0xff]
        %v209 = vld [vmem:[%s151] sm:$0xff]
        %v210 = vpack.c.bf16 %v209, %v209
        %v211 = vunpack.c.l.bf16 %v210
        %v212 = vsub.f32 %v209, %v211
        %v213 = vpack.c.bf16 %v212, %v212
        %v214 = vunpack.c.l.bf16 %v213
        %v215 = vsub.f32 %v212, %v214
        %v216 = vpack.c.bf16 %v215, %v215
        %v249 = vunpack.c.l.b16 %v177
        %v250 = vunpack.c.h.b16 %v177
        %v251 = vunpack.c.l.b16 %v178
        %v252 = vunpack.c.h.b16 %v178
        %v253 = vunpack.c.l.b16 %v179
        %v254 = vunpack.c.h.b16 %v179
        %v255 = vunpack.c.l.b16 %v180
        %v256 = vunpack.c.h.b16 %v180
        %v257 = vunpack.c.l.b16 %v181
        %v258 = vunpack.c.h.b16 %v181
        %v259 = vunpack.c.l.b16 %v182
        %v260 = vunpack.c.h.b16 %v182
        %v261 = vunpack.c.l.b16 %v183
        %v262 = vunpack.c.h.b16 %v183
        %v263 = vunpack.c.l.b16 %v184
        %v264 = vunpack.c.h.b16 %v184
        %v265 = vunpack.c.l.b16 %v185
        %v266 = vunpack.c.h.b16 %v185
        %v267 = vunpack.c.l.b16 %v186
        %v268 = vunpack.c.h.b16 %v186
        %v269 = vunpack.c.l.b16 %v187
        %v270 = vunpack.c.h.b16 %v187
        %v271 = vunpack.c.l.b16 %v188
        %v272 = vunpack.c.h.b16 %v188
        %v273 = vunpack.c.l.b16 %v189
        %v274 = vunpack.c.h.b16 %v189
        %v275 = vunpack.c.l.b16 %v190
        %v276 = vunpack.c.h.b16 %v190
        %v277 = vunpack.c.l.b16 %v191
        %v278 = vunpack.c.h.b16 %v191
        %v279 = vunpack.c.l.b16 %v192
        %v280 = vunpack.c.h.b16 %v192
        %v281 = vunpack.c.l.b16 %v193
        %v282 = vunpack.c.h.b16 %v193
        %v283 = vunpack.c.l.b16 %v194
        %v284 = vunpack.c.h.b16 %v194
        %v285 = vunpack.c.l.b16 %v195
        %v286 = vunpack.c.h.b16 %v195
        %v287 = vunpack.c.l.b16 %v196
        %v288 = vunpack.c.h.b16 %v196
        %v289 = vunpack.c.l.b16 %v197
        %v290 = vunpack.c.h.b16 %v197
        %v291 = vunpack.c.l.b16 %v198
        %v292 = vunpack.c.h.b16 %v198
        %v293 = vunpack.c.l.b16 %v199
        %v294 = vunpack.c.h.b16 %v199
        %v295 = vunpack.c.l.b16 %v200
        %v296 = vunpack.c.h.b16 %v200
        %v297 = vunpack.c.l.b16 %v201
        %v298 = vunpack.c.h.b16 %v201
        %v299 = vunpack.c.l.b16 %v202
        %v300 = vunpack.c.h.b16 %v202
        %v301 = vunpack.c.l.b16 %v203
        %v302 = vunpack.c.h.b16 %v203
        %v303 = vunpack.c.l.b16 %v204
        %v304 = vunpack.c.h.b16 %v204
        %v305 = vunpack.c.l.b16 %v205
        %v306 = vunpack.c.h.b16 %v205
        %v307 = vunpack.c.l.b16 %v206
        %v308 = vunpack.c.h.b16 %v206
        %v309 = vunpack.c.l.b16 %v207
        %v310 = vunpack.c.h.b16 %v207
        %v311 = vunpack.c.l.b16 %v208
        %v312 = vunpack.c.h.b16 %v208
        %v313 = vpack.c.b16 %v253, %v249
        %v314 = vpack.c.b16 %v254, %v250
        %v315 = vpack.c.b16 %v255, %v251
        %v316 = vpack.c.b16 %v256, %v252
        %v317 = vpack.c.b16 %v261, %v257
        %v318 = vpack.c.b16 %v262, %v258
        %v319 = vpack.c.b16 %v263, %v259
        %v320 = vpack.c.b16 %v264, %v260
        %v321 = vpack.c.b16 %v269, %v265
        %v322 = vpack.c.b16 %v270, %v266
        %v323 = vpack.c.b16 %v271, %v267
        %v324 = vpack.c.b16 %v272, %v268
        %v325 = vpack.c.b16 %v277, %v273
        %v326 = vpack.c.b16 %v278, %v274
        %v327 = vpack.c.b16 %v279, %v275
        %v328 = vpack.c.b16 %v280, %v276
        %v329 = vpack.c.b16 %v285, %v281
        %v330 = vpack.c.b16 %v286, %v282
        %v331 = vpack.c.b16 %v287, %v283
        %v332 = vpack.c.b16 %v288, %v284
        %v333 = vpack.c.b16 %v293, %v289
        %v334 = vpack.c.b16 %v294, %v290
        %v335 = vpack.c.b16 %v295, %v291
        %v336 = vpack.c.b16 %v296, %v292
        %v337 = vpack.c.b16 %v301, %v297
        %v338 = vpack.c.b16 %v302, %v298
        %v339 = vpack.c.b16 %v303, %v299
        %v340 = vpack.c.b16 %v304, %v300
        %v341 = vpack.c.b16 %v309, %v305
        %v342 = vpack.c.b16 %v310, %v306
        %v343 = vpack.c.b16 %v311, %v307
        %v344 = vpack.c.b16 %v312, %v308
        %377 = vmatprep.subr.bf16.mxu0 %v314
        %378 = vmatpush1.bf16.msra.mxu0 %v313
        %379 = vmatprep.subr.bf16.mxu0 %v318
        %380 = vmatpush1.bf16.msra.mxu0 %v317
        %381 = vmatprep.subr.bf16.mxu0 %v322
        %382 = vmatpush1.bf16.msra.mxu0 %v321
        %383 = vmatprep.subr.bf16.mxu0 %v326
        %384 = vmatpush1.bf16.msra.mxu0 %v325
        %385 = vmatprep.subr.bf16.mxu0 %v330
        %386 = vmatpush1.bf16.msra.mxu0 %v329
        %387 = vmatprep.subr.bf16.mxu0 %v334
        %388 = vmatpush1.bf16.msra.mxu0 %v333
        %389 = vmatprep.subr.bf16.mxu0 %v338
        %390 = vmatpush1.bf16.msra.mxu0 %v337
        %391 = vmatprep.subr.bf16.mxu0 %v342
        %392 = vmatpush1.bf16.msra.mxu0 %v341
        %393 = vmatprep.subr.bf16.mxu0 0
        %394 = vmatpush1.bf16.msra.mxu0 0
        %395 = vmatprep.subr.bf16.mxu0 0
        %396 = vmatpush1.bf16.msra.mxu0 0
        %397 = vmatprep.subr.bf16.mxu0 0
        %398 = vmatpush1.bf16.msra.mxu0 0
        %399 = vmatprep.subr.bf16.mxu0 0
        %400 = vmatpush1.bf16.msra.mxu0 0
        %401 = vmatprep.subr.bf16.mxu0 0
        %402 = vmatpush1.bf16.msra.mxu0 0
        %403 = vmatprep.subr.bf16.mxu0 0
        %404 = vmatpush1.bf16.msra.mxu0 0
        %405 = vmatprep.subr.bf16.mxu0 0
        %406 = vmatpush1.bf16.msra.mxu0 0
        %407 = vmatprep.subr.bf16.mxu0 0
        %408 = vmatpush1.bf16.msra.mxu0 0
        %409 = vmatprep.mubr.bf16.mxu0 0
        %410 = vmatmul.mubr.bf16.gmra.mrb[0].mxu0 %v213
        %v411 = vpop.f32.mrb[0].mxu0
        %v412 = vadd.f32 0.0, %v411
        %v413 = vpop.f32.mrb[0].mxu0
        %v414 = vadd.f32 0.0, %v413
        %v415 = vpop.f32.mrb[0].mxu0
        %v416 = vpop.f32.mrb[0].mxu0
        %417 = vdwg.mxu0
        %418 = vmatprep.subr.bf16.mxu0 %v316
        %419 = vmatpush1.bf16.msra.mxu0 %v315
        %420 = vmatprep.subr.bf16.mxu0 %v320
        %421 = vmatpush1.bf16.msra.mxu0 %v319
        %422 = vmatprep.subr.bf16.mxu0 %v324
        %423 = vmatpush1.bf16.msra.mxu0 %v323
        %424 = vmatprep.subr.bf16.mxu0 %v328
        %425 = vmatpush1.bf16.msra.mxu0 %v327
        %426 = vmatprep.subr.bf16.mxu0 %v332
        %427 = vmatpush1.bf16.msra.mxu0 %v331
        %428 = vmatprep.subr.bf16.mxu0 %v336
        %429 = vmatpush1.bf16.msra.mxu0 %v335
        %430 = vmatprep.subr.bf16.mxu0 %v340
        %431 = vmatpush1.bf16.msra.mxu0 %v339
        %432 = vmatprep.subr.bf16.mxu0 %v344
        %433 = vmatpush1.bf16.msra.mxu0 %v343
        %434 = vmatprep.subr.bf16.mxu0 0
        %435 = vmatpush1.bf16.msra.mxu0 0
        %436 = vmatprep.subr.bf16.mxu0 0
        %437 = vmatpush1.bf16.msra.mxu0 0
        %438 = vmatprep.subr.bf16.mxu0 0
        %439 = vmatpush1.bf16.msra.mxu0 0
        %440 = vmatprep.subr.bf16.mxu0 0
        %441 = vmatpush1.bf16.msra.mxu0 0
        %442 = vmatprep.subr.bf16.mxu0 0
        %443 = vmatpush1.bf16.msra.mxu0 0
        %444 = vmatprep.subr.bf16.mxu0 0
        %445 = vmatpush1.bf16.msra.mxu0 0
        %446 = vmatprep.subr.bf16.mxu0 0
        %447 = vmatpush1.bf16.msra.mxu0 0
        %448 = vmatprep.subr.bf16.mxu0 0
        %449 = vmatpush1.bf16.msra.mxu0 0
        %450 = vmatprep.mubr.bf16.mxu0 0
        %451 = vmatmul.mubr.bf16.gmra.mrb[0].mxu0 %v213
        %v452 = vpop.f32.mrb[0].mxu0
        %v453 = vadd.f32 0.0, %v452
        %v454 = vpop.f32.mrb[0].mxu0
        %v455 = vadd.f32 0.0, %v454
        %v456 = vpop.f32.mrb[0].mxu0
        %v457 = vpop.f32.mrb[0].mxu0
        %458 = vdwg.mxu0
        %459 = vmatprep.subr.bf16.mxu0 %v314
        %460 = vmatpush1.bf16.msra.mxu0 %v313
        %461 = vmatprep.subr.bf16.mxu0 %v318
        %462 = vmatpush1.bf16.msra.mxu0 %v317
        %463 = vmatprep.subr.bf16.mxu0 %v322
        %464 = vmatpush1.bf16.msra.mxu0 %v321
        %465 = vmatprep.subr.bf16.mxu0 %v326
        %466 = vmatpush1.bf16.msra.mxu0 %v325
        %467 = vmatprep.subr.bf16.mxu0 %v330
        %468 = vmatpush1.bf16.msra.mxu0 %v329
        %469 = vmatprep.subr.bf16.mxu0 %v334
        %470 = vmatpush1.bf16.msra.mxu0 %v333
        %471 = vmatprep.subr.bf16.mxu0 %v338
        %472 = vmatpush1.bf16.msra.mxu0 %v337
        %473 = vmatprep.subr.bf16.mxu0 %v342
        %474 = vmatpush1.bf16.msra.mxu0 %v341
        %475 = vmatprep.subr.bf16.mxu0 0
        %476 = vmatpush1.bf16.msra.mxu0 0
        %477 = vmatprep.subr.bf16.mxu0 0
        %478 = vmatpush1.bf16.msra.mxu0 0
        %479 = vmatprep.subr.bf16.mxu0 0
        %480 = vmatpush1.bf16.msra.mxu0 0
        %481 = vmatprep.subr.bf16.mxu0 0
        %482 = vmatpush1.bf16.msra.mxu0 0
        %483 = vmatprep.subr.bf16.mxu0 0
        %484 = vmatpush1.bf16.msra.mxu0 0
        %485 = vmatprep.subr.bf16.mxu0 0
        %486 = vmatpush1.bf16.msra.mxu0 0
        %487 = vmatprep.subr.bf16.mxu0 0
        %488 = vmatpush1.bf16.msra.mxu0 0
        %489 = vmatprep.subr.bf16.mxu0 0
        %490 = vmatpush1.bf16.msra.mxu0 0
        %491 = vmatprep.mubr.bf16.mxu0 0
        %492 = vmatmul.mubr.bf16.gmra.mrb[0].mxu0 %v210
        %v493 = vpop.f32.mrb[0].mxu0
        %v494 = vadd.f32 %v412, %v493
        %v495 = vpop.f32.mrb[0].mxu0
        %v496 = vadd.f32 %v414, %v495
        %v497 = vpop.f32.mrb[0].mxu0
        %v498 = vpop.f32.mrb[0].mxu0
        %499 = vdwg.mxu0
        %500 = vmatprep.subr.bf16.mxu0 %v316
        %501 = vmatpush1.bf16.msra.mxu0 %v315
        %502 = vmatprep.subr.bf16.mxu0 %v320
        %503 = vmatpush1.bf16.msra.mxu0 %v319
        %504 = vmatprep.subr.bf16.mxu0 %v324
        %505 = vmatpush1.bf16.msra.mxu0 %v323
        %506 = vmatprep.subr.bf16.mxu0 %v328
        %507 = vmatpush1.bf16.msra.mxu0 %v327
        %508 = vmatprep.subr.bf16.mxu0 %v332
        %509 = vmatpush1.bf16.msra.mxu0 %v331
        %510 = vmatprep.subr.bf16.mxu0 %v336
        %511 = vmatpush1.bf16.msra.mxu0 %v335
        %512 = vmatprep.subr.bf16.mxu0 %v340
        %513 = vmatpush1.bf16.msra.mxu0 %v339
        %514 = vmatprep.subr.bf16.mxu0 %v344
        %515 = vmatpush1.bf16.msra.mxu0 %v343
        %516 = vmatprep.subr.bf16.mxu0 0
        %517 = vmatpush1.bf16.msra.mxu0 0
        %518 = vmatprep.subr.bf16.mxu0 0
        %519 = vmatpush1.bf16.msra.mxu0 0
        %520 = vmatprep.subr.bf16.mxu0 0
        %521 = vmatpush1.bf16.msra.mxu0 0
        %522 = vmatprep.subr.bf16.mxu0 0
        %523 = vmatpush1.bf16.msra.mxu0 0
        %524 = vmatprep.subr.bf16.mxu0 0
        %525 = vmatpush1.bf16.msra.mxu0 0
        %526 = vmatprep.subr.bf16.mxu0 0
        %527 = vmatpush1.bf16.msra.mxu0 0
        %528 = vmatprep.subr.bf16.mxu0 0
        %529 = vmatpush1.bf16.msra.mxu0 0
        %530 = vmatprep.subr.bf16.mxu0 0
        %531 = vmatpush1.bf16.msra.mxu0 0
        %532 = vmatprep.mubr.bf16.mxu0 0
        %533 = vmatmul.mubr.bf16.gmra.mrb[0].mxu0 %v210
        %v534 = vpop.f32.mrb[0].mxu0
        %v535 = vadd.f32 %v453, %v534
        %v536 = vpop.f32.mrb[0].mxu0
        %v537 = vadd.f32 %v455, %v536
        %v538 = vpop.f32.mrb[0].mxu0
        %v539 = vpop.f32.mrb[0].mxu0
        %540 = vdwg.mxu0
        %541 = vmatprep.subr.bf16.mxu0 %v314
        %542 = vmatpush1.bf16.msra.mxu0 %v313
        %543 = vmatprep.subr.bf16.mxu0 %v318
        %544 = vmatpush1.bf16.msra.mxu0 %v317
        %545 = vmatprep.subr.bf16.mxu0 %v322
        %546 = vmatpush1.bf16.msra.mxu0 %v321
        %547 = vmatprep.subr.bf16.mxu0 %v326
        %548 = vmatpush1.bf16.msra.mxu0 %v325
        %549 = vmatprep.subr.bf16.mxu0 %v330
        %550 = vmatpush1.bf16.msra.mxu0 %v329
        %551 = vmatprep.subr.bf16.mxu0 %v334
        %552 = vmatpush1.bf16.msra.mxu0 %v333
        %553 = vmatprep.subr.bf16.mxu0 %v338
        %554 = vmatpush1.bf16.msra.mxu0 %v337
        %555 = vmatprep.subr.bf16.mxu0 %v342
        %556 = vmatpush1.bf16.msra.mxu0 %v341
        %557 = vmatprep.subr.bf16.mxu0 0
        %558 = vmatpush1.bf16.msra.mxu0 0
        %559 = vmatprep.subr.bf16.mxu0 0
        %560 = vmatpush1.bf16.msra.mxu0 0
        %561 = vmatprep.subr.bf16.mxu0 0
        %562 = vmatpush1.bf16.msra.mxu0 0
        %563 = vmatprep.subr.bf16.mxu0 0
        %564 = vmatpush1.bf16.msra.mxu0 0
        %565 = vmatprep.subr.bf16.mxu0 0
        %566 = vmatpush1.bf16.msra.mxu0 0
        %567 = vmatprep.subr.bf16.mxu0 0
        %568 = vmatpush1.bf16.msra.mxu0 0
        %569 = vmatprep.subr.bf16.mxu0 0
        %570 = vmatpush1.bf16.msra.mxu0 0
        %571 = vmatprep.subr.bf16.mxu0 0
        %572 = vmatpush1.bf16.msra.mxu0 0
        %573 = vmatprep.mubr.bf16.mxu0 0
        %574 = vmatmul.mubr.bf16.gmra.mrb[0].mxu0 %v216
        %v575 = vpop.f32.mrb[0].mxu0
        %v576 = vadd.f32 0.0, %v575
        %v577 = vpop.f32.mrb[0].mxu0
        %v578 = vadd.f32 0.0, %v577
        %v579 = vpop.f32.mrb[0].mxu0
        %v580 = vpop.f32.mrb[0].mxu0
        %581 = vdwg.mxu0
        %582 = vmatprep.subr.bf16.mxu0 %v316
        %583 = vmatpush1.bf16.msra.mxu0 %v315
        %584 = vmatprep.subr.bf16.mxu0 %v320
        %585 = vmatpush1.bf16.msra.mxu0 %v319
        %586 = vmatprep.subr.bf16.mxu0 %v324
        %587 = vmatpush1.bf16.msra.mxu0 %v323
        %588 = vmatprep.subr.bf16.mxu0 %v328
        %589 = vmatpush1.bf16.msra.mxu0 %v327
        %590 = vmatprep.subr.bf16.mxu0 %v332
        %591 = vmatpush1.bf16.msra.mxu0 %v331
        %592 = vmatprep.subr.bf16.mxu0 %v336
        %593 = vmatpush1.bf16.msra.mxu0 %v335
        %594 = vmatprep.subr.bf16.mxu0 %v340
        %595 = vmatpush1.bf16.msra.mxu0 %v339
        %596 = vmatprep.subr.bf16.mxu0 %v344
        %597 = vmatpush1.bf16.msra.mxu0 %v343
        %598 = vmatprep.subr.bf16.mxu0 0
        %599 = vmatpush1.bf16.msra.mxu0 0
        %600 = vmatprep.subr.bf16.mxu0 0
        %601 = vmatpush1.bf16.msra.mxu0 0
        %602 = vmatprep.subr.bf16.mxu0 0
        %603 = vmatpush1.bf16.msra.mxu0 0
        %604 = vmatprep.subr.bf16.mxu0 0
        %605 = vmatpush1.bf16.msra.mxu0 0
        %606 = vmatprep.subr.bf16.mxu0 0
        %607 = vmatpush1.bf16.msra.mxu0 0
        %608 = vmatprep.subr.bf16.mxu0 0
        %609 = vmatpush1.bf16.msra.mxu0 0
        %610 = vmatprep.subr.bf16.mxu0 0
        %611 = vmatpush1.bf16.msra.mxu0 0
        %612 = vmatprep.subr.bf16.mxu0 0
        %613 = vmatpush1.bf16.msra.mxu0 0
        %614 = vmatprep.mubr.bf16.mxu0 0
        %615 = vmatmul.mubr.bf16.gmra.mrb[0].mxu0 %v216
        %v616 = vpop.f32.mrb[0].mxu0
        %v617 = vadd.f32 0.0, %v616
        %v618 = vpop.f32.mrb[0].mxu0
        %v619 = vadd.f32 0.0, %v618
        %v620 = vpop.f32.mrb[0].mxu0
        %v621 = vpop.f32.mrb[0].mxu0
        %622 = vdwg.mxu0
        %v623 = vadd.f32 %v494, %v576
        %v624 = vadd.f32 %v496, %v578
        %v625 = vadd.f32 %v535, %v617
        %v626 = vadd.f32 %v537, %v619
        %s627 = scalar_lea.vmem [#allocation5], 256
        %v628 = vld [vmem:[%s627] sm:$0xff]
        %v629 = vld [vmem:[%s627 + $0x8] sm:$0xff]
        %v630 = vld [vmem:[%s627 + $0x10] sm:$0xff]
        %v631 = vld [vmem:[%s627 + $0x18] sm:$0xff]
        %v632 = vld [vmem:[%s627 + $0x20] sm:$0xff]
        %v633 = vld [vmem:[%s627 + $0x28] sm:$0xff]
        %v634 = vld [vmem:[%s627 + $0x30] sm:$0xff]
        %v635 = vld [vmem:[%s627 + $0x38] sm:$0xff]
        %v636 = vld [vmem:[%s627 + $0x40] sm:$0xff]
        %v637 = vld [vmem:[%s627 + $0x48] sm:$0xff]
        %v638 = vld [vmem:[%s627 + $0x50] sm:$0xff]
        %v639 = vld [vmem:[%s627 + $0x58] sm:$0xff]
        %v640 = vld [vmem:[%s627 + $0x60] sm:$0xff]
        %v641 = vld [vmem:[%s627 + $0x68] sm:$0xff]
        %v642 = vld [vmem:[%s627 + $0x70] sm:$0xff]
        %v643 = vld [vmem:[%s627 + $0x78] sm:$0xff]
        %v644 = vld [vmem:[%s627 + $0x80] sm:$0xff]
        %v645 = vld [vmem:[%s627 + $0x88] sm:$0xff]
        %v646 = vld [vmem:[%s627 + $0x90] sm:$0xff]
        %v647 = vld [vmem:[%s627 + $0x98] sm:$0xff]
        %v648 = vld [vmem:[%s627 + $0xa0] sm:$0xff]
        %v649 = vld [vmem:[%s627 + $0xa8] sm:$0xff]
        %v650 = vld [vmem:[%s627 + $0xb0] sm:$0xff]
        %v651 = vld [vmem:[%s627 + $0xb8] sm:$0xff]
        %v652 = vld [vmem:[%s627 + $0xc0] sm:$0xff]
        %v653 = vld [vmem:[%s627 + $0xc8] sm:$0xff]
        %v654 = vld [vmem:[%s627 + $0xd0] sm:$0xff]
        %v655 = vld [vmem:[%s627 + $0xd8] sm:$0xff]
        %v656 = vld [vmem:[%s627 + $0xe0] sm:$0xff]
        %v657 = vld [vmem:[%s627 + $0xe8] sm:$0xff]
        %v658 = vld [vmem:[%s627 + $0xf0] sm:$0xff]
        %v659 = vld [vmem:[%s627 + $0xf8] sm:$0xff]
        %s660 = scalar_lea.vmem %s151, 8 [#allocation2]
        %v661 = vld [vmem:[%s660] sm:$0xff]
        %v662 = vpack.c.bf16 %v661, %v661
        %v663 = vunpack.c.l.bf16 %v662
        %v664 = vsub.f32 %v661, %v663
        %v665 = vpack.c.bf16 %v664, %v664
        %v666 = vunpack.c.l.bf16 %v665
        %v667 = vsub.f32 %v664, %v666
        %v668 = vpack.c.bf16 %v667, %v667
        %v701 = vunpack.c.l.b16 %v628
        %v702 = vunpack.c.h.b16 %v628
        %v703 = vunpack.c.l.b16 %v629
        %v704 = vunpack.c.h.b16 %v629
        %v705 = vunpack.c.l.b16 %v630
        %v706 = vunpack.c.h.b16 %v630
        %v707 = vunpack.c.l.b16 %v631
        %v708 = vunpack.c.h.b16 %v631
        %v709 = vunpack.c.l.b16 %v632
        %v710 = vunpack.c.h.b16 %v632
        %v711 = vunpack.c.l.b16 %v633
        %v712 = vunpack.c.h.b16 %v633
        %v713 = vunpack.c.l.b16 %v634
        %v714 = vunpack.c.h.b16 %v634
        %v715 = vunpack.c.l.b16 %v635
        %v716 = vunpack.c.h.b16 %v635
        %v717 = vunpack.c.l.b16 %v636
        %v718 = vunpack.c.h.b16 %v636
        %v719 = vunpack.c.l.b16 %v637
        %v720 = vunpack.c.h.b16 %v637
        %v721 = vunpack.c.l.b16 %v638
        %v722 = vunpack.c.h.b16 %v638
        %v723 = vunpack.c.l.b16 %v639
        %v724 = vunpack.c.h.b16 %v639
        %v725 = vunpack.c.l.b16 %v640
        %v726 = vunpack.c.h.b16 %v640
        %v727 = vunpack.c.l.b16 %v641
        %v728 = vunpack.c.h.b16 %v641
        %v729 = vunpack.c.l.b16 %v642
        %v730 = vunpack.c.h.b16 %v642
        %v731 = vunpack.c.l.b16 %v643
        %v732 = vunpack.c.h.b16 %v643
        %v733 = vunpack.c.l.b16 %v644
        %v734 = vunpack.c.h.b16 %v644
        %v735 = vunpack.c.l.b16 %v645
        %v736 = vunpack.c.h.b16 %v645
        %v737 = vunpack.c.l.b16 %v646
        %v738 = vunpack.c.h.b16 %v646
        %v739 = vunpack.c.l.b16 %v647
        %v740 = vunpack.c.h.b16 %v647
        %v741 = vunpack.c.l.b16 %v648
        %v742 = vunpack.c.h.b16 %v648
        %v743 = vunpack.c.l.b16 %v649
        %v744 = vunpack.c.h.b16 %v649
        %v745 = vunpack.c.l.b16 %v650
        %v746 = vunpack.c.h.b16 %v650
        %v747 = vunpack.c.l.b16 %v651
        %v748 = vunpack.c.h.b16 %v651
        %v749 = vunpack.c.l.b16 %v652
        %v750 = vunpack.c.h.b16 %v652
        %v751 = vunpack.c.l.b16 %v653
        %v752 = vunpack.c.h.b16 %v653
        %v753 = vunpack.c.l.b16 %v654
        %v754 = vunpack.c.h.b16 %v654
        %v755 = vunpack.c.l.b16 %v655
        %v756 = vunpack.c.h.b16 %v655
        %v757 = vunpack.c.l.b16 %v656
        %v758 = vunpack.c.h.b16 %v656
        %v759 = vunpack.c.l.b16 %v657
        %v760 = vunpack.c.h.b16 %v657
        %v761 = vunpack.c.l.b16 %v658
        %v762 = vunpack.c.h.b16 %v658
        %v763 = vunpack.c.l.b16 %v659
        %v764 = vunpack.c.h.b16 %v659
        %v765 = vpack.c.b16 %v705, %v701
        %v766 = vpack.c.b16 %v706, %v702
        %v767 = vpack.c.b16 %v707, %v703
        %v768 = vpack.c.b16 %v708, %v704
        %v769 = vpack.c.b16 %v713, %v709
        %v770 = vpack.c.b16 %v714, %v710
        %v771 = vpack.c.b16 %v715, %v711
        %v772 = vpack.c.b16 %v716, %v712
        %v773 = vpack.c.b16 %v721, %v717
        %v774 = vpack.c.b16 %v722, %v718
        %v775 = vpack.c.b16 %v723, %v719
        %v776 = vpack.c.b16 %v724, %v720
        %v777 = vpack.c.b16 %v729, %v725
        %v778 = vpack.c.b16 %v730, %v726
        %v779 = vpack.c.b16 %v731, %v727
        %v780 = vpack.c.b16 %v732, %v728
        %v781 = vpack.c.b16 %v737, %v733
        %v782 = vpack.c.b16 %v738, %v734
        %v783 = vpack.c.b16 %v739, %v735
        %v784 = vpack.c.b16 %v740, %v736
        %v785 = vpack.c.b16 %v745, %v741
        %v786 = vpack.c.b16 %v746, %v742
        %v787 = vpack.c.b16 %v747, %v743
        %v788 = vpack.c.b16 %v748, %v744
        %v789 = vpack.c.b16 %v753, %v749
        %v790 = vpack.c.b16 %v754, %v750
        %v791 = vpack.c.b16 %v755, %v751
        %v792 = vpack.c.b16 %v756, %v752
        %v793 = vpack.c.b16 %v761, %v757
        %v794 = vpack.c.b16 %v762, %v758
        %v795 = vpack.c.b16 %v763, %v759
        %v796 = vpack.c.b16 %v764, %v760
        %829 = vmatprep.subr.bf16.mxu0 %v766
        %830 = vmatpush1.bf16.msra.mxu0 %v765
        %831 = vmatprep.subr.bf16.mxu0 %v770
        %832 = vmatpush1.bf16.msra.mxu0 %v769
        %833 = vmatprep.subr.bf16.mxu0 %v774
        %834 = vmatpush1.bf16.msra.mxu0 %v773
        %835 = vmatprep.subr.bf16.mxu0 %v778
        %836 = vmatpush1.bf16.msra.mxu0 %v777
        %837 = vmatprep.subr.bf16.mxu0 %v782
        %838 = vmatpush1.bf16.msra.mxu0 %v781
        %839 = vmatprep.subr.bf16.mxu0 %v786
        %840 = vmatpush1.bf16.msra.mxu0 %v785
        %841 = vmatprep.subr.bf16.mxu0 %v790
        %842 = vmatpush1.bf16.msra.mxu0 %v789
        %843 = vmatprep.subr.bf16.mxu0 %v794
        %844 = vmatpush1.bf16.msra.mxu0 %v793
        %845 = vmatprep.subr.bf16.mxu0 0
        %846 = vmatpush1.bf16.msra.mxu0 0
        %847 = vmatprep.subr.bf16.mxu0 0
        %848 = vmatpush1.bf16.msra.mxu0 0
        %849 = vmatprep.subr.bf16.mxu0 0
        %850 = vmatpush1.bf16.msra.mxu0 0
        %851 = vmatprep.subr.bf16.mxu0 0
        %852 = vmatpush1.bf16.msra.mxu0 0
        %853 = vmatprep.subr.bf16.mxu0 0
        %854 = vmatpush1.bf16.msra.mxu0 0
        %855 = vmatprep.subr.bf16.mxu0 0
        %856 = vmatpush1.bf16.msra.mxu0 0
        %857 = vmatprep.subr.bf16.mxu0 0
        %858 = vmatpush1.bf16.msra.mxu0 0
        %859 = vmatprep.subr.bf16.mxu0 0
        %860 = vmatpush1.bf16.msra.mxu0 0
        %861 = vmatprep.mubr.bf16.mxu0 0
        %862 = vmatmul.mubr.bf16.gmra.mrb[0].mxu0 %v662
        %v863 = vpop.f32.mrb[0].mxu0
        %v864 = vadd.f32 0.0, %v863
        %v865 = vpop.f32.mrb[0].mxu0
        %v866 = vadd.f32 0.0, %v865
        %v867 = vpop.f32.mrb[0].mxu0
        %v868 = vpop.f32.mrb[0].mxu0
        %869 = vdwg.mxu0
        %870 = vmatprep.subr.bf16.mxu0 %v768
        %871 = vmatpush1.bf16.msra.mxu0 %v767
        %872 = vmatprep.subr.bf16.mxu0 %v772
        %873 = vmatpush1.bf16.msra.mxu0 %v771
        %874 = vmatprep.subr.bf16.mxu0 %v776
        %875 = vmatpush1.bf16.msra.mxu0 %v775
        %876 = vmatprep.subr.bf16.mxu0 %v780
        %877 = vmatpush1.bf16.msra.mxu0 %v779
        %878 = vmatprep.subr.bf16.mxu0 %v784
        %879 = vmatpush1.bf16.msra.mxu0 %v783
        %880 = vmatprep.subr.bf16.mxu0 %v788
        %881 = vmatpush1.bf16.msra.mxu0 %v787
        %882 = vmatprep.subr.bf16.mxu0 %v792
        %883 = vmatpush1.bf16.msra.mxu0 %v791
        %884 = vmatprep.subr.bf16.mxu0 %v796
        %885 = vmatpush1.bf16.msra.mxu0 %v795
        %886 = vmatprep.subr.bf16.mxu0 0
        %887 = vmatpush1.bf16.msra.mxu0 0
        %888 = vmatprep.subr.bf16.mxu0 0
        %889 = vmatpush1.bf16.msra.mxu0 0
        %890 = vmatprep.subr.bf16.mxu0 0
        %891 = vmatpush1.bf16.msra.mxu0 0
        %892 = vmatprep.subr.bf16.mxu0 0
        %893 = vmatpush1.bf16.msra.mxu0 0
        %894 = vmatprep.subr.bf16.mxu0 0
        %895 = vmatpush1.bf16.msra.mxu0 0
        %896 = vmatprep.subr.bf16.mxu0 0
        %897 = vmatpush1.bf16.msra.mxu0 0
        %898 = vmatprep.subr.bf16.mxu0 0
        %899 = vmatpush1.bf16.msra.mxu0 0
        %900 = vmatprep.subr.bf16.mxu0 0
        %901 = vmatpush1.bf16.msra.mxu0 0
        %902 = vmatprep.mubr.bf16.mxu0 0
        %903 = vmatmul.mubr.bf16.gmra.mrb[0].mxu0 %v662
        %v904 = vpop.f32.mrb[0].mxu0
        %v905 = vadd.f32 0.0, %v904
        %v906 = vpop.f32.mrb[0].mxu0
        %v907 = vadd.f32 0.0, %v906
        %v908 = vpop.f32.mrb[0].mxu0
        %v909 = vpop.f32.mrb[0].mxu0
        %910 = vdwg.mxu0
        %v911 = vadd.f32 %v623, %v864
        %v912 = vadd.f32 %v624, %v866
        %v913 = vadd.f32 %v625, %v905
        %v914 = vadd.f32 %v626, %v907
        %915 = vmatprep.subr.bf16.mxu0 %v766
        %916 = vmatpush1.bf16.msra.mxu0 %v765
        %917 = vmatprep.subr.bf16.mxu0 %v770
        %918 = vmatpush1.bf16.msra.mxu0 %v769
        %919 = vmatprep.subr.bf16.mxu0 %v774
        %920 = vmatpush1.bf16.msra.mxu0 %v773
        %921 = vmatprep.subr.bf16.mxu0 %v778
        %922 = vmatpush1.bf16.msra.mxu0 %v777
        %923 = vmatprep.subr.bf16.mxu0 %v782
        %924 = vmatpush1.bf16.msra.mxu0 %v781
        %925 = vmatprep.subr.bf16.mxu0 %v786
        %926 = vmatpush1.bf16.msra.mxu0 %v785
        %927 = vmatprep.subr.bf16.mxu0 %v790
        %928 = vmatpush1.bf16.msra.mxu0 %v789
        %929 = vmatprep.subr.bf16.mxu0 %v794
        %930 = vmatpush1.bf16.msra.mxu0 %v793
        %931 = vmatprep.subr.bf16.mxu0 0
        %932 = vmatpush1.bf16.msra.mxu0 0
        %933 = vmatprep.subr.bf16.mxu0 0
        %934 = vmatpush1.bf16.msra.mxu0 0
        %935 = vmatprep.subr.bf16.mxu0 0
        %936 = vmatpush1.bf16.msra.mxu0 0
        %937 = vmatprep.subr.bf16.mxu0 0
        %938 = vmatpush1.bf16.msra.mxu0 0
        %939 = vmatprep.subr.bf16.mxu0 0
        %940 = vmatpush1.bf16.msra.mxu0 0
        %941 = vmatprep.subr.bf16.mxu0 0
        %942 = vmatpush1.bf16.msra.mxu0 0
        %943 = vmatprep.subr.bf16.mxu0 0
        %944 = vmatpush1.bf16.msra.mxu0 0
        %945 = vmatprep.subr.bf16.mxu0 0
        %946 = vmatpush1.bf16.msra.mxu0 0
        %947 = vmatprep.mubr.bf16.mxu0 0
        %948 = vmatmul.mubr.bf16.gmra.mrb[0].mxu0 %v665
        %v949 = vpop.f32.mrb[0].mxu0
        %v950 = vadd.f32 0.0, %v949
        %v951 = vpop.f32.mrb[0].mxu0
        %v952 = vadd.f32 0.0, %v951
        %v953 = vpop.f32.mrb[0].mxu0
        %v954 = vpop.f32.mrb[0].mxu0
        %955 = vdwg.mxu0
        %956 = vmatprep.subr.bf16.mxu0 %v768
        %957 = vmatpush1.bf16.msra.mxu0 %v767
        %958 = vmatprep.subr.bf16.mxu0 %v772
        %959 = vmatpush1.bf16.msra.mxu0 %v771
        %960 = vmatprep.subr.bf16.mxu0 %v776
        %961 = vmatpush1.bf16.msra.mxu0 %v775
        %962 = vmatprep.subr.bf16.mxu0 %v780
        %963 = vmatpush1.bf16.msra.mxu0 %v779
        %964 = vmatprep.subr.bf16.mxu0 %v784
        %965 = vmatpush1.bf16.msra.mxu0 %v783
        %966 = vmatprep.subr.bf16.mxu0 %v788
        %967 = vmatpush1.bf16.msra.mxu0 %v787
        %968 = vmatprep.subr.bf16.mxu0 %v792
        %969 = vmatpush1.bf16.msra.mxu0 %v791
        %970 = vmatprep.subr.bf16.mxu0 %v796
        %971 = vmatpush1.bf16.msra.mxu0 %v795
        %972 = vmatprep.subr.bf16.mxu0 0
        %973 = vmatpush1.bf16.msra.mxu0 0
        %974 = vmatprep.subr.bf16.mxu0 0
        %975 = vmatpush1.bf16.msra.mxu0 0
        %976 = vmatprep.subr.bf16.mxu0 0
        %977 = vmatpush1.bf16.msra.mxu0 0
        %978 = vmatprep.subr.bf16.mxu0 0
        %979 = vmatpush1.bf16.msra.mxu0 0
        %980 = vmatprep.subr.bf16.mxu0 0
        %981 = vmatpush1.bf16.msra.mxu0 0
        %982 = vmatprep.subr.bf16.mxu0 0
        %983 = vmatpush1.bf16.msra.mxu0 0
        %984 = vmatprep.subr.bf16.mxu0 0
        %985 = vmatpush1.bf16.msra.mxu0 0
        %986 = vmatprep.subr.bf16.mxu0 0
        %987 = vmatpush1.bf16.msra.mxu0 0
        %988 = vmatprep.mubr.bf16.mxu0 0
        %989 = vmatmul.mubr.bf16.gmra.mrb[0].mxu0 %v665
        %v990 = vpop.f32.mrb[0].mxu0
        %v991 = vadd.f32 0.0, %v990
        %v992 = vpop.f32.mrb[0].mxu0
        %v993 = vadd.f32 0.0, %v992
        %v994 = vpop.f32.mrb[0].mxu0
        %v995 = vpop.f32.mrb[0].mxu0
        %996 = vdwg.mxu0
        %v997 = vadd.f32 %v911, %v950
        %v998 = vadd.f32 %v912, %v952
        %v999 = vadd.f32 %v913, %v991
        %v1000 = vadd.f32 %v914, %v993
        %1001 = vmatprep.subr.bf16.mxu0 %v766
        %1002 = vmatpush1.bf16.msra.mxu0 %v765
        %1003 = vmatprep.subr.bf16.mxu0 %v770
        %1004 = vmatpush1.bf16.msra.mxu0 %v769
        %1005 = vmatprep.subr.bf16.mxu0 %v774
        %1006 = vmatpush1.bf16.msra.mxu0 %v773
        %1007 = vmatprep.subr.bf16.mxu0 %v778
        %1008 = vmatpush1.bf16.msra.mxu0 %v777
        %1009 = vmatprep.subr.bf16.mxu0 %v782
        %1010 = vmatpush1.bf16.msra.mxu0 %v781
        %1011 = vmatprep.subr.bf16.mxu0 %v786
        %1012 = vmatpush1.bf16.msra.mxu0 %v785
        %1013 = vmatprep.subr.bf16.mxu0 %v790
        %1014 = vmatpush1.bf16.msra.mxu0 %v789
        %1015 = vmatprep.subr.bf16.mxu0 %v794
        %1016 = vmatpush1.bf16.msra.mxu0 %v793
        %1017 = vmatprep.subr.bf16.mxu0 0
        %1018 = vmatpush1.bf16.msra.mxu0 0
        %1019 = vmatprep.subr.bf16.mxu0 0
        %1020 = vmatpush1.bf16.msra.mxu0 0
        %1021 = vmatprep.subr.bf16.mxu0 0
        %1022 = vmatpush1.bf16.msra.mxu0 0
        %1023 = vmatprep.subr.bf16.mxu0 0
        %1024 = vmatpush1.bf16.msra.mxu0 0
        %1025 = vmatprep.subr.bf16.mxu0 0
        %1026 = vmatpush1.bf16.msra.mxu0 0
        %1027 = vmatprep.subr.bf16.mxu0 0
        %1028 = vmatpush1.bf16.msra.mxu0 0
        %1029 = vmatprep.subr.bf16.mxu0 0
        %1030 = vmatpush1.bf16.msra.mxu0 0
        %1031 = vmatprep.subr.bf16.mxu0 0
        %1032 = vmatpush1.bf16.msra.mxu0 0
        %1033 = vmatprep.mubr.bf16.mxu0 0
        %1034 = vmatmul.mubr.bf16.gmra.mrb[0].mxu0 %v668
        %v1035 = vpop.f32.mrb[0].mxu0
        %v1036 = vadd.f32 0.0, %v1035
        %v1037 = vpop.f32.mrb[0].mxu0
        %v1038 = vadd.f32 0.0, %v1037
        %v1039 = vpop.f32.mrb[0].mxu0
        %v1040 = vpop.f32.mrb[0].mxu0
        %1041 = vdwg.mxu0
        %1042 = vmatprep.subr.bf16.mxu0 %v768
        %1043 = vmatpush1.bf16.msra.mxu0 %v767
        %1044 = vmatprep.subr.bf16.mxu0 %v772
        %1045 = vmatpush1.bf16.msra.mxu0 %v771
        %1046 = vmatprep.subr.bf16.mxu0 %v776
        %1047 = vmatpush1.bf16.msra.mxu0 %v775
        %1048 = vmatprep.subr.bf16.mxu0 %v780
        %1049 = vmatpush1.bf16.msra.mxu0 %v779
        %1050 = vmatprep.subr.bf16.mxu0 %v784
        %1051 = vmatpush1.bf16.msra.mxu0 %v783
        %1052 = vmatprep.subr.bf16.mxu0 %v788
        %1053 = vmatpush1.bf16.msra.mxu0 %v787
        %1054 = vmatprep.subr.bf16.mxu0 %v792
        %1055 = vmatpush1.bf16.msra.mxu0 %v791
        %1056 = vmatprep.subr.bf16.mxu0 %v796
        %1057 = vmatpush1.bf16.msra.mxu0 %v795
        %1058 = vmatprep.subr.bf16.mxu0 0
        %1059 = vmatpush1.bf16.msra.mxu0 0
        %1060 = vmatprep.subr.bf16.mxu0 0
        %1061 = vmatpush1.bf16.msra.mxu0 0
        %1062 = vmatprep.subr.bf16.mxu0 0
        %1063 = vmatpush1.bf16.msra.mxu0 0
        %1064 = vmatprep.subr.bf16.mxu0 0
        %1065 = vmatpush1.bf16.msra.mxu0 0
        %1066 = vmatprep.subr.bf16.mxu0 0
        %1067 = vmatpush1.bf16.msra.mxu0 0
        %1068 = vmatprep.subr.bf16.mxu0 0
        %1069 = vmatpush1.bf16.msra.mxu0 0
        %1070 = vmatprep.subr.bf16.mxu0 0
        %1071 = vmatpush1.bf16.msra.mxu0 0
        %1072 = vmatprep.subr.bf16.mxu0 0
        %1073 = vmatpush1.bf16.msra.mxu0 0
        %1074 = vmatprep.mubr.bf16.mxu0 0
        %1075 = vmatmul.mubr.bf16.gmra.mrb[0].mxu0 %v668
        %v1076 = vpop.f32.mrb[0].mxu0
        %v1077 = vadd.f32 0.0, %v1076
        %v1078 = vpop.f32.mrb[0].mxu0
        %v1079 = vadd.f32 0.0, %v1078
        %v1080 = vpop.f32.mrb[0].mxu0
        %v1081 = vpop.f32.mrb[0].mxu0
        %1082 = vdwg.mxu0
        %v1083 = vadd.f32 %v997, %v1036
        %v1084 = vadd.f32 %v998, %v1038
        %v1085 = vadd.f32 %v999, %v1077
        %v1086 = vadd.f32 %v1000, %v1079
        %s1087 = scalar_lea.vmem [#allocation5], 512
        %v1088 = vld [vmem:[%s1087] sm:$0xff]
        %v1089 = vld [vmem:[%s1087 + $0x8] sm:$0xff]
        %v1090 = vld [vmem:[%s1087 + $0x10] sm:$0xff]
        %v1091 = vld [vmem:[%s1087 + $0x18] sm:$0xff]
        %v1092 = vld [vmem:[%s1087 + $0x20] sm:$0xff]
        %v1093 = vld [vmem:[%s1087 + $0x28] sm:$0xff]
        %v1094 = vld [vmem:[%s1087 + $0x30] sm:$0xff]
        %v1095 = vld [vmem:[%s1087 + $0x38] sm:$0xff]
        %v1096 = vld [vmem:[%s1087 + $0x40] sm:$0xff]
        %v1097 = vld [vmem:[%s1087 + $0x48] sm:$0xff]
        %v1098 = vld [vmem:[%s1087 + $0x50] sm:$0xff]
        %v1099 = vld [vmem:[%s1087 + $0x58] sm:$0xff]
        %v1100 = vld [vmem:[%s1087 + $0x60] sm:$0xff]
        %v1101 = vld [vmem:[%s1087 + $0x68] sm:$0xff]
        %v1102 = vld [vmem:[%s1087 + $0x70] sm:$0xff]
        %v1103 = vld [vmem:[%s1087 + $0x78] sm:$0xff]
        %v1104 = vld [vmem:[%s1087 + $0x80] sm:$0xff]
        %v1105 = vld [vmem:[%s1087 + $0x88] sm:$0xff]
        %v1106 = vld [vmem:[%s1087 + $0x90] sm:$0xff]
        %v1107 = vld [vmem:[%s1087 + $0x98] sm:$0xff]
        %v1108 = vld [vmem:[%s1087 + $0xa0] sm:$0xff]
        %v1109 = vld [vmem:[%s1087 + $0xa8] sm:$0xff]
        %v1110 = vld [vmem:[%s1087 + $0xb0] sm:$0xff]
        %v1111 = vld [vmem:[%s1087 + $0xb8] sm:$0xff]
        %v1112 = vld [vmem:[%s1087 + $0xc0] sm:$0xff]
        %v1113 = vld [vmem:[%s1087 + $0xc8] sm:$0xff]
        %v1114 = vld [vmem:[%s1087 + $0xd0] sm:$0xff]
        %v1115 = vld [vmem:[%s1087 + $0xd8] sm:$0xff]
        %v1116 = vld [vmem:[%s1087 + $0xe0] sm:$0xff]
        %v1117 = vld [vmem:[%s1087 + $0xe8] sm:$0xff]
        %v1118 = vld [vmem:[%s1087 + $0xf0] sm:$0xff]
        %v1119 = vld [vmem:[%s1087 + $0xf8] sm:$0xff]
        %s1120 = scalar_lea.vmem %s151, 16 [#allocation2]
        %v1121 = vld [vmem:[%s1120] sm:$0xff]
        %v1122 = vpack.c.bf16 %v1121, %v1121
        %v1123 = vunpack.c.l.bf16 %v1122
        %v1124 = vsub.f32 %v1121, %v1123
        %v1125 = vpack.c.bf16 %v1124, %v1124
        %v1126 = vunpack.c.l.bf16 %v1125
        %v1127 = vsub.f32 %v1124, %v1126
        %v1128 = vpack.c.bf16 %v1127, %v1127
        %v1161 = vunpack.c.l.b16 %v1088
        %v1162 = vunpack.c.h.b16 %v1088
        %v1163 = vunpack.c.l.b16 %v1089
        %v1164 = vunpack.c.h.b16 %v1089
        %v1165 = vunpack.c.l.b16 %v1090
        %v1166 = vunpack.c.h.b16 %v1090
        %v1167 = vunpack.c.l.b16 %v1091
        %v1168 = vunpack.c.h.b16 %v1091
        %v1169 = vunpack.c.l.b16 %v1092
        %v1170 = vunpack.c.h.b16 %v1092
        %v1171 = vunpack.c.l.b16 %v1093
        %v1172 = vunpack.c.h.b16 %v1093
        %v1173 = vunpack.c.l.b16 %v1094
        %v1174 = vunpack.c.h.b16 %v1094
        %v1175 = vunpack.c.l.b16 %v1095
        %v1176 = vunpack.c.h.b16 %v1095
        %v1177 = vunpack.c.l.b16 %v1096
        %v1178 = vunpack.c.h.b16 %v1096
        %v1179 = vunpack.c.l.b16 %v1097
        %v1180 = vunpack.c.h.b16 %v1097
        %v1181 = vunpack.c.l.b16 %v1098
        %v1182 = vunpack.c.h.b16 %v1098
        %v1183 = vunpack.c.l.b16 %v1099
        %v1184 = vunpack.c.h.b16 %v1099
        %v1185 = vunpack.c.l.b16 %v1100
        %v1186 = vunpack.c.h.b16 %v1100
        %v1187 = vunpack.c.l.b16 %v1101
        %v1188 = vunpack.c.h.b16 %v1101
        %v1189 = vunpack.c.l.b16 %v1102
        %v1190 = vunpack.c.h.b16 %v1102
        %v1191 = vunpack.c.l.b16 %v1103
        %v1192 = vunpack.c.h.b16 %v1103
        %v1193 = vunpack.c.l.b16 %v1104
        %v1194 = vunpack.c.h.b16 %v1104
        %v1195 = vunpack.c.l.b16 %v1105
        %v1196 = vunpack.c.h.b16 %v1105
        %v1197 = vunpack.c.l.b16 %v1106
        %v1198 = vunpack.c.h.b16 %v1106
        %v1199 = vunpack.c.l.b16 %v1107
        %v1200 = vunpack.c.h.b16 %v1107
        %v1201 = vunpack.c.l.b16 %v1108
        %v1202 = vunpack.c.h.b16 %v1108
        %v1203 = vunpack.c.l.b16 %v1109
        %v1204 = vunpack.c.h.b16 %v1109
        %v1205 = vunpack.c.l.b16 %v1110
        %v1206 = vunpack.c.h.b16 %v1110
        %v1207 = vunpack.c.l.b16 %v1111
        %v1208 = vunpack.c.h.b16 %v1111
        %v1209 = vunpack.c.l.b16 %v1112
        %v1210 = vunpack.c.h.b16 %v1112
        %v1211 = vunpack.c.l.b16 %v1113
        %v1212 = vunpack.c.h.b16 %v1113
        %v1213 = vunpack.c.l.b16 %v1114
        %v1214 = vunpack.c.h.b16 %v1114
        %v1215 = vunpack.c.l.b16 %v1115
        %v1216 = vunpack.c.h.b16 %v1115
        %v1217 = vunpack.c.l.b16 %v1116
        %v1218 = vunpack.c.h.b16 %v1116
        %v1219 = vunpack.c.l.b16 %v1117
        %v1220 = vunpack.c.h.b16 %v1117
        %v1221 = vunpack.c.l.b16 %v1118
        %v1222 = vunpack.c.h.b16 %v1118
        %v1223 = vunpack.c.l.b16 %v1119
        %v1224 = vunpack.c.h.b16 %v1119
        %v1225 = vpack.c.b16 %v1165, %v1161
        %v1226 = vpack.c.b16 %v1166, %v1162
        %v1227 = vpack.c.b16 %v1167, %v1163
        %v1228 = vpack.c.b16 %v1168, %v1164
        %v1229 = vpack.c.b16 %v1173, %v1169
        %v1230 = vpack.c.b16 %v1174, %v1170
        %v1231 = vpack.c.b16 %v1175, %v1171
        %v1232 = vpack.c.b16 %v1176, %v1172
        %v1233 = vpack.c.b16 %v1181, %v1177
        %v1234 = vpack.c.b16 %v1182, %v1178
        %v1235 = vpack.c.b16 %v1183, %v1179
        %v1236 = vpack.c.b16 %v1184, %v1180
        %v1237 = vpack.c.b16 %v1189, %v1185
        %v1238 = vpack.c.b16 %v1190, %v1186
        %v1239 = vpack.c.b16 %v1191, %v1187
        %v1240 = vpack.c.b16 %v1192, %v1188
        %v1241 = vpack.c.b16 %v1197, %v1193
        %v1242 = vpack.c.b16 %v1198, %v1194
        %v1243 = vpack.c.b16 %v1199, %v1195
        %v1244 = vpack.c.b16 %v1200, %v1196
        %v1245 = vpack.c.b16 %v1205, %v1201
        %v1246 = vpack.c.b16 %v1206, %v1202
        %v1247 = vpack.c.b16 %v1207, %v1203
        %v1248 = vpack.c.b16 %v1208, %v1204
        %v1249 = vpack.c.b16 %v1213, %v1209
        %v1250 = vpack.c.b16 %v1214, %v1210
        %v1251 = vpack.c.b16 %v1215, %v1211
        %v1252 = vpack.c.b16 %v1216, %v1212
        %v1253 = vpack.c.b16 %v1221, %v1217
        %v1254 = vpack.c.b16 %v1222, %v1218
        %v1255 = vpack.c.b16 %v1223, %v1219
        %v1256 = vpack.c.b16 %v1224, %v1220
        %1289 = vmatprep.subr.bf16.mxu0 %v1226
        %1290 = vmatpush1.bf16.msra.mxu0 %v1225
        %1291 = vmatprep.subr.bf16.mxu0 %v1230
        %1292 = vmatpush1.bf16.msra.mxu0 %v1229
        %1293 = vmatprep.subr.bf16.mxu0 %v1234
        %1294 = vmatpush1.bf16.msra.mxu0 %v1233
        %1295 = vmatprep.subr.bf16.mxu0 %v1238
        %1296 = vmatpush1.bf16.msra.mxu0 %v1237
        %1297 = vmatprep.subr.bf16.mxu0 %v1242
        %1298 = vmatpush1.bf16.msra.mxu0 %v1241
        %1299 = vmatprep.subr.bf16.mxu0 %v1246
        %1300 = vmatpush1.bf16.msra.mxu0 %v1245
        %1301 = vmatprep.subr.bf16.mxu0 %v1250
        %1302 = vmatpush1.bf16.msra.mxu0 %v1249
        %1303 = vmatprep.subr.bf16.mxu0 %v1254
        %1304 = vmatpush1.bf16.msra.mxu0 %v1253
        %1305 = vmatprep.subr.bf16.mxu0 0
        %1306 = vmatpush1.bf16.msra.mxu0 0
        %1307 = vmatprep.subr.bf16.mxu0 0
        %1308 = vmatpush1.bf16.msra.mxu0 0
        %1309 = vmatprep.subr.bf16.mxu0 0
        %1310 = vmatpush1.bf16.msra.mxu0 0
        %1311 = vmatprep.subr.bf16.mxu0 0
        %1312 = vmatpush1.bf16.msra.mxu0 0
        %1313 = vmatprep.subr.bf16.mxu0 0
        %1314 = vmatpush1.bf16.msra.mxu0 0
        %1315 = vmatprep.subr.bf16.mxu0 0
        %1316 = vmatpush1.bf16.msra.mxu0 0
        %1317 = vmatprep.subr.bf16.mxu0 0
        %1318 = vmatpush1.bf16.msra.mxu0 0
        %1319 = vmatprep.subr.bf16.mxu0 0
        %1320 = vmatpush1.bf16.msra.mxu0 0
        %1321 = vmatprep.mubr.bf16.mxu0 0
        %1322 = vmatmul.mubr.bf16.gmra.mrb[0].mxu0 %v1122
        %v1323 = vpop.f32.mrb[0].mxu0
        %v1324 = vadd.f32 0.0, %v1323
        %v1325 = vpop.f32.mrb[0].mxu0
        %v1326 = vadd.f32 0.0, %v1325
        %v1327 = vpop.f32.mrb[0].mxu0
        %v1328 = vpop.f32.mrb[0].mxu0
        %1329 = vdwg.mxu0
        %1330 = vmatprep.subr.bf16.mxu0 %v1228
        %1331 = vmatpush1.bf16.msra.mxu0 %v1227
        %1332 = vmatprep.subr.bf16.mxu0 %v1232
        %1333 = vmatpush1.bf16.msra.mxu0 %v1231
        %1334 = vmatprep.subr.bf16.mxu0 %v1236
        %1335 = vmatpush1.bf16.msra.mxu0 %v1235
        %1336 = vmatprep.subr.bf16.mxu0 %v1240
        %1337 = vmatpush1.bf16.msra.mxu0 %v1239
        %1338 = vmatprep.subr.bf16.mxu0 %v1244
        %1339 = vmatpush1.bf16.msra.mxu0 %v1243
        %1340 = vmatprep.subr.bf16.mxu0 %v1248
        %1341 = vmatpush1.bf16.msra.mxu0 %v1247
        %1342 = vmatprep.subr.bf16.mxu0 %v1252
        %1343 = vmatpush1.bf16.msra.mxu0 %v1251
        %1344 = vmatprep.subr.bf16.mxu0 %v1256
        %1345 = vmatpush1.bf16.msra.mxu0 %v1255
        %1346 = vmatprep.subr.bf16.mxu0 0
        %1347 = vmatpush1.bf16.msra.mxu0 0
        %1348 = vmatprep.subr.bf16.mxu0 0
        %1349 = vmatpush1.bf16.msra.mxu0 0
        %1350 = vmatprep.subr.bf16.mxu0 0
        %1351 = vmatpush1.bf16.msra.mxu0 0
        %1352 = vmatprep.subr.bf16.mxu0 0
        %1353 = vmatpush1.bf16.msra.mxu0 0
        %1354 = vmatprep.subr.bf16.mxu0 0
        %1355 = vmatpush1.bf16.msra.mxu0 0
        %1356 = vmatprep.subr.bf16.mxu0 0
        %1357 = vmatpush1.bf16.msra.mxu0 0
        %1358 = vmatprep.subr.bf16.mxu0 0
        %1359 = vmatpush1.bf16.msra.mxu0 0
        %1360 = vmatprep.subr.bf16.mxu0 0
        %1361 = vmatpush1.bf16.msra.mxu0 0
        %1362 = vmatprep.mubr.bf16.mxu0 0
        %1363 = vmatmul.mubr.bf16.gmra.mrb[0].mxu0 %v1122
        %v1364 = vpop.f32.mrb[0].mxu0
        %v1365 = vadd.f32 0.0, %v1364
        %v1366 = vpop.f32.mrb[0].mxu0
        %v1367 = vadd.f32 0.0, %v1366
        %v1368 = vpop.f32.mrb[0].mxu0
        %v1369 = vpop.f32.mrb[0].mxu0
        %1370 = vdwg.mxu0
        %v1371 = vadd.f32 %v1083, %v1324
        %v1372 = vadd.f32 %v1084, %v1326
        %v1373 = vadd.f32 %v1085, %v1365
        %v1374 = vadd.f32 %v1086, %v1367
        %1375 = vmatprep.subr.bf16.mxu0 %v1226
        %1376 = vmatpush1.bf16.msra.mxu0 %v1225
        %1377 = vmatprep.subr.bf16.mxu0 %v1230
        %1378 = vmatpush1.bf16.msra.mxu0 %v1229
        %1379 = vmatprep.subr.bf16.mxu0 %v1234
        %1380 = vmatpush1.bf16.msra.mxu0 %v1233
        %1381 = vmatprep.subr.bf16.mxu0 %v1238
        %1382 = vmatpush1.bf16.msra.mxu0 %v1237
        %1383 = vmatprep.subr.bf16.mxu0 %v1242
        %1384 = vmatpush1.bf16.msra.mxu0 %v1241
        %1385 = vmatprep.subr.bf16.mxu0 %v1246
        %1386 = vmatpush1.bf16.msra.mxu0 %v1245
        %1387 = vmatprep.subr.bf16.mxu0 %v1250
        %1388 = vmatpush1.bf16.msra.mxu0 %v1249
        %1389 = vmatprep.subr.bf16.mxu0 %v1254
        %1390 = vmatpush1.bf16.msra.mxu0 %v1253
        %1391 = vmatprep.subr.bf16.mxu0 0
        %1392 = vmatpush1.bf16.msra.mxu0 0
        %1393 = vmatprep.subr.bf16.mxu0 0
        %1394 = vmatpush1.bf16.msra.mxu0 0
        %1395 = vmatprep.subr.bf16.mxu0 0
        %1396 = vmatpush1.bf16.msra.mxu0 0
        %1397 = vmatprep.subr.bf16.mxu0 0
        %1398 = vmatpush1.bf16.msra.mxu0 0
        %1399 = vmatprep.subr.bf16.mxu0 0
        %1400 = vmatpush1.bf16.msra.mxu0 0
        %1401 = vmatprep.subr.bf16.mxu0 0
        %1402 = vmatpush1.bf16.msra.mxu0 0
        %1403 = vmatprep.subr.bf16.mxu0 0
        %1404 = vmatpush1.bf16.msra.mxu0 0
        %1405 = vmatprep.subr.bf16.mxu0 0
        %1406 = vmatpush1.bf16.msra.mxu0 0
        %1407 = vmatprep.mubr.bf16.mxu0 0
        %1408 = vmatmul.mubr.bf16.gmra.mrb[0].mxu0 %v1125
        %v1409 = vpop.f32.mrb[0].mxu0
        %v1410 = vadd.f32 0.0, %v1409
        %v1411 = vpop.f32.mrb[0].mxu0
        %v1412 = vadd.f32 0.0, %v1411
        %v1413 = vpop.f32.mrb[0].mxu0
        %v1414 = vpop.f32.mrb[0].mxu0
        %1415 = vdwg.mxu0
        %1416 = vmatprep.subr.bf16.mxu0 %v1228
        %1417 = vmatpush1.bf16.msra.mxu0 %v1227
        %1418 = vmatprep.subr.bf16.mxu0 %v1232
        %1419 = vmatpush1.bf16.msra.mxu0 %v1231
        %1420 = vmatprep.subr.bf16.mxu0 %v1236
        %1421 = vmatpush1.bf16.msra.mxu0 %v1235
        %1422 = vmatprep.subr.bf16.mxu0 %v1240
        %1423 = vmatpush1.bf16.msra.mxu0 %v1239
        %1424 = vmatprep.subr.bf16.mxu0 %v1244
        %1425 = vmatpush1.bf16.msra.mxu0 %v1243
        %1426 = vmatprep.subr.bf16.mxu0 %v1248
        %1427 = vmatpush1.bf16.msra.mxu0 %v1247
        %1428 = vmatprep.subr.bf16.mxu0 %v1252
        %1429 = vmatpush1.bf16.msra.mxu0 %v1251
        %1430 = vmatprep.subr.bf16.mxu0 %v1256
        %1431 = vmatpush1.bf16.msra.mxu0 %v1255
        %1432 = vmatprep.subr.bf16.mxu0 0
        %1433 = vmatpush1.bf16.msra.mxu0 0
        %1434 = vmatprep.subr.bf16.mxu0 0
        %1435 = vmatpush1.bf16.msra.mxu0 0
        %1436 = vmatprep.subr.bf16.mxu0 0
        %1437 = vmatpush1.bf16.msra.mxu0 0
        %1438 = vmatprep.subr.bf16.mxu0 0
        %1439 = vmatpush1.bf16.msra.mxu0 0
        %1440 = vmatprep.subr.bf16.mxu0 0
        %1441 = vmatpush1.bf16.msra.mxu0 0
        %1442 = vmatprep.subr.bf16.mxu0 0
        %1443 = vmatpush1.bf16.msra.mxu0 0
        %1444 = vmatprep.subr.bf16.mxu0 0
        %1445 = vmatpush1.bf16.msra.mxu0 0
        %1446 = vmatprep.subr.bf16.mxu0 0
        %1447 = vmatpush1.bf16.msra.mxu0 0
        %1448 = vmatprep.mubr.bf16.mxu0 0
        %1449 = vmatmul.mubr.bf16.gmra.mrb[0].mxu0 %v1125
        %v1450 = vpop.f32.mrb[0].mxu0
        %v1451 = vadd.f32 0.0, %v1450
        %v1452 = vpop.f32.mrb[0].mxu0
        %v1453 = vadd.f32 0.0, %v1452
        %v1454 = vpop.f32.mrb[0].mxu0
        %v1455 = vpop.f32.mrb[0].mxu0
        %1456 = vdwg.mxu0
        %v1457 = vadd.f32 %v1371, %v1410
        %v1458 = vadd.f32 %v1372, %v1412
        %v1459 = vadd.f32 %v1373, %v1451
        %v1460 = vadd.f32 %v1374, %v1453
        %1461 = vmatprep.subr.bf16.mxu0 %v1226
        %1462 = vmatpush1.bf16.msra.mxu0 %v1225
        %1463 = vmatprep.subr.bf16.mxu0 %v1230
        %1464 = vmatpush1.bf16.msra.mxu0 %v1229
        %1465 = vmatprep.subr.bf16.mxu0 %v1234
        %1466 = vmatpush1.bf16.msra.mxu0 %v1233
        %1467 = vmatprep.subr.bf16.mxu0 %v1238
        %1468 = vmatpush1.bf16.msra.mxu0 %v1237
        %1469 = vmatprep.subr.bf16.mxu0 %v1242
        %1470 = vmatpush1.bf16.msra.mxu0 %v1241
        %1471 = vmatprep.subr.bf16.mxu0 %v1246
        %1472 = vmatpush1.bf16.msra.mxu0 %v1245
        %1473 = vmatprep.subr.bf16.mxu0 %v1250
        %1474 = vmatpush1.bf16.msra.mxu0 %v1249
        %1475 = vmatprep.subr.bf16.mxu0 %v1254
        %1476 = vmatpush1.bf16.msra.mxu0 %v1253
        %1477 = vmatprep.subr.bf16.mxu0 0
        %1478 = vmatpush1.bf16.msra.mxu0 0
        %1479 = vmatprep.subr.bf16.mxu0 0
        %1480 = vmatpush1.bf16.msra.mxu0 0
        %1481 = vmatprep.subr.bf16.mxu0 0
        %1482 = vmatpush1.bf16.msra.mxu0 0
        %1483 = vmatprep.subr.bf16.mxu0 0
        %1484 = vmatpush1.bf16.msra.mxu0 0
        %1485 = vmatprep.subr.bf16.mxu0 0
        %1486 = vmatpush1.bf16.msra.mxu0 0
        %1487 = vmatprep.subr.bf16.mxu0 0
        %1488 = vmatpush1.bf16.msra.mxu0 0
        %1489 = vmatprep.subr.bf16.mxu0 0
        %1490 = vmatpush1.bf16.msra.mxu0 0
        %1491 = vmatprep.subr.bf16.mxu0 0
        %1492 = vmatpush1.bf16.msra.mxu0 0
        %1493 = vmatprep.mubr.bf16.mxu0 0
        %1494 = vmatmul.mubr.bf16.gmra.mrb[0].mxu0 %v1128
        %v1495 = vpop.f32.mrb[0].mxu0
        %v1496 = vadd.f32 0.0, %v1495
        %v1497 = vpop.f32.mrb[0].mxu0
        %v1498 = vadd.f32 0.0, %v1497
        %v1499 = vpop.f32.mrb[0].mxu0
        %v1500 = vpop.f32.mrb[0].mxu0
        %1501 = vdwg.mxu0
        %1502 = vmatprep.subr.bf16.mxu0 %v1228
        %1503 = vmatpush1.bf16.msra.mxu0 %v1227
        %1504 = vmatprep.subr.bf16.mxu0 %v1232
        %1505 = vmatpush1.bf16.msra.mxu0 %v1231
        %1506 = vmatprep.subr.bf16.mxu0 %v1236
        %1507 = vmatpush1.bf16.msra.mxu0 %v1235
        %1508 = vmatprep.subr.bf16.mxu0 %v1240
        %1509 = vmatpush1.bf16.msra.mxu0 %v1239
        %1510 = vmatprep.subr.bf16.mxu0 %v1244
        %1511 = vmatpush1.bf16.msra.mxu0 %v1243
        %1512 = vmatprep.subr.bf16.mxu0 %v1248
        %1513 = vmatpush1.bf16.msra.mxu0 %v1247
        %1514 = vmatprep.subr.bf16.mxu0 %v1252
        %1515 = vmatpush1.bf16.msra.mxu0 %v1251
        %1516 = vmatprep.subr.bf16.mxu0 %v1256
        %1517 = vmatpush1.bf16.msra.mxu0 %v1255
        %1518 = vmatprep.subr.bf16.mxu0 0
        %1519 = vmatpush1.bf16.msra.mxu0 0
        %1520 = vmatprep.subr.bf16.mxu0 0
        %1521 = vmatpush1.bf16.msra.mxu0 0
        %1522 = vmatprep.subr.bf16.mxu0 0
        %1523 = vmatpush1.bf16.msra.mxu0 0
        %1524 = vmatprep.subr.bf16.mxu0 0
        %1525 = vmatpush1.bf16.msra.mxu0 0
        %1526 = vmatprep.subr.bf16.mxu0 0
        %1527 = vmatpush1.bf16.msra.mxu0 0
        %1528 = vmatprep.subr.bf16.mxu0 0
        %1529 = vmatpush1.bf16.msra.mxu0 0
        %1530 = vmatprep.subr.bf16.mxu0 0
        %1531 = vmatpush1.bf16.msra.mxu0 0
        %1532 = vmatprep.subr.bf16.mxu0 0
        %1533 = vmatpush1.bf16.msra.mxu0 0
        %1534 = vmatprep.mubr.bf16.mxu0 0
        %1535 = vmatmul.mubr.bf16.gmra.mrb[0].mxu0 %v1128
        %v1536 = vpop.f32.mrb[0].mxu0
        %v1537 = vadd.f32 0.0, %v1536
        %v1538 = vpop.f32.mrb[0].mxu0
        %v1539 = vadd.f32 0.0, %v1538
        %v1540 = vpop.f32.mrb[0].mxu0
        %v1541 = vpop.f32.mrb[0].mxu0
        %1542 = vdwg.mxu0
        %v1543 = vadd.f32 %v1457, %v1496
        %v1544 = vadd.f32 %v1458, %v1498
        %v1545 = vadd.f32 %v1459, %v1537
        %v1546 = vadd.f32 %v1460, %v1539
        %s1547 = scalar_lea.vmem [#allocation5], 768
        %v1548 = vld [vmem:[%s1547] sm:$0xff]
        %v1549 = vld [vmem:[%s1547 + $0x8] sm:$0xff]
        %v1550 = vld [vmem:[%s1547 + $0x10] sm:$0xff]
        %v1551 = vld [vmem:[%s1547 + $0x18] sm:$0xff]
        %v1552 = vld [vmem:[%s1547 + $0x20] sm:$0xff]
        %v1553 = vld [vmem:[%s1547 + $0x28] sm:$0xff]
        %v1554 = vld [vmem:[%s1547 + $0x30] sm:$0xff]
        %v1555 = vld [vmem:[%s1547 + $0x38] sm:$0xff]
        %v1556 = vld [vmem:[%s1547 + $0x40] sm:$0xff]
        %v1557 = vld [vmem:[%s1547 + $0x48] sm:$0xff]
        %v1558 = vld [vmem:[%s1547 + $0x50] sm:$0xff]
        %v1559 = vld [vmem:[%s1547 + $0x58] sm:$0xff]
        %v1560 = vld [vmem:[%s1547 + $0x60] sm:$0xff]
        %v1561 = vld [vmem:[%s1547 + $0x68] sm:$0xff]
        %v1562 = vld [vmem:[%s1547 + $0x70] sm:$0xff]
        %v1563 = vld [vmem:[%s1547 + $0x78] sm:$0xff]
        %v1564 = vld [vmem:[%s1547 + $0x80] sm:$0xff]
        %v1565 = vld [vmem:[%s1547 + $0x88] sm:$0xff]
        %v1566 = vld [vmem:[%s1547 + $0x90] sm:$0xff]
        %v1567 = vld [vmem:[%s1547 + $0x98] sm:$0xff]
        %v1568 = vld [vmem:[%s1547 + $0xa0] sm:$0xff]
        %v1569 = vld [vmem:[%s1547 + $0xa8] sm:$0xff]
        %v1570 = vld [vmem:[%s1547 + $0xb0] sm:$0xff]
        %v1571 = vld [vmem:[%s1547 + $0xb8] sm:$0xff]
        %v1572 = vld [vmem:[%s1547 + $0xc0] sm:$0xff]
        %v1573 = vld [vmem:[%s1547 + $0xc8] sm:$0xff]
        %v1574 = vld [vmem:[%s1547 + $0xd0] sm:$0xff]
        %v1575 = vld [vmem:[%s1547 + $0xd8] sm:$0xff]
        %v1576 = vld [vmem:[%s1547 + $0xe0] sm:$0xff]
        %v1577 = vld [vmem:[%s1547 + $0xe8] sm:$0xff]
        %v1578 = vld [vmem:[%s1547 + $0xf0] sm:$0xff]
        %v1579 = vld [vmem:[%s1547 + $0xf8] sm:$0xff]
        %s1580 = scalar_lea.vmem %s151, 24 [#allocation2]
        %v1581 = vld [vmem:[%s1580] sm:$0xff]
        %v1582 = vpack.c.bf16 %v1581, %v1581
        %v1583 = vunpack.c.l.bf16 %v1582
        %v1584 = vsub.f32 %v1581, %v1583
        %v1585 = vpack.c.bf16 %v1584, %v1584
        %v1586 = vunpack.c.l.bf16 %v1585
        %v1587 = vsub.f32 %v1584, %v1586
        %v1588 = vpack.c.bf16 %v1587, %v1587
        %v1621 = vunpack.c.l.b16 %v1548
        %v1622 = vunpack.c.h.b16 %v1548
        %v1623 = vunpack.c.l.b16 %v1549
        %v1624 = vunpack.c.h.b16 %v1549
        %v1625 = vunpack.c.l.b16 %v1550
        %v1626 = vunpack.c.h.b16 %v1550
        %v1627 = vunpack.c.l.b16 %v1551
        %v1628 = vunpack.c.h.b16 %v1551
        %v1629 = vunpack.c.l.b16 %v1552
        %v1630 = vunpack.c.h.b16 %v1552
        %v1631 = vunpack.c.l.b16 %v1553
        %v1632 = vunpack.c.h.b16 %v1553
        %v1633 = vunpack.c.l.b16 %v1554
        %v1634 = vunpack.c.h.b16 %v1554
        %v1635 = vunpack.c.l.b16 %v1555
        %v1636 = vunpack.c.h.b16 %v1555
        %v1637 = vunpack.c.l.b16 %v1556
        %v1638 = vunpack.c.h.b16 %v1556
        %v1639 = vunpack.c.l.b16 %v1557
        %v1640 = vunpack.c.h.b16 %v1557
        %v1641 = vunpack.c.l.b16 %v1558
        %v1642 = vunpack.c.h.b16 %v1558
        %v1643 = vunpack.c.l.b16 %v1559
        %v1644 = vunpack.c.h.b16 %v1559
        %v1645 = vunpack.c.l.b16 %v1560
        %v1646 = vunpack.c.h.b16 %v1560
        %v1647 = vunpack.c.l.b16 %v1561
        %v1648 = vunpack.c.h.b16 %v1561
        %v1649 = vunpack.c.l.b16 %v1562
        %v1650 = vunpack.c.h.b16 %v1562
        %v1651 = vunpack.c.l.b16 %v1563
        %v1652 = vunpack.c.h.b16 %v1563
        %v1653 = vunpack.c.l.b16 %v1564
        %v1654 = vunpack.c.h.b16 %v1564
        %v1655 = vunpack.c.l.b16 %v1565
        %v1656 = vunpack.c.h.b16 %v1565
        %v1657 = vunpack.c.l.b16 %v1566
        %v1658 = vunpack.c.h.b16 %v1566
        %v1659 = vunpack.c.l.b16 %v1567
        %v1660 = vunpack.c.h.b16 %v1567
        %v1661 = vunpack.c.l.b16 %v1568
        %v1662 = vunpack.c.h.b16 %v1568
        %v1663 = vunpack.c.l.b16 %v1569
        %v1664 = vunpack.c.h.b16 %v1569
        %v1665 = vunpack.c.l.b16 %v1570
        %v1666 = vunpack.c.h.b16 %v1570
        %v1667 = vunpack.c.l.b16 %v1571
        %v1668 = vunpack.c.h.b16 %v1571
        %v1669 = vunpack.c.l.b16 %v1572
        %v1670 = vunpack.c.h.b16 %v1572
        %v1671 = vunpack.c.l.b16 %v1573
        %v1672 = vunpack.c.h.b16 %v1573
        %v1673 = vunpack.c.l.b16 %v1574
        %v1674 = vunpack.c.h.b16 %v1574
        %v1675 = vunpack.c.l.b16 %v1575
        %v1676 = vunpack.c.h.b16 %v1575
        %v1677 = vunpack.c.l.b16 %v1576
        %v1678 = vunpack.c.h.b16 %v1576
        %v1679 = vunpack.c.l.b16 %v1577
        %v1680 = vunpack.c.h.b16 %v1577
        %v1681 = vunpack.c.l.b16 %v1578
        %v1682 = vunpack.c.h.b16 %v1578
        %v1683 = vunpack.c.l.b16 %v1579
        %v1684 = vunpack.c.h.b16 %v1579
        %v1685 = vpack.c.b16 %v1625, %v1621
        %v1686 = vpack.c.b16 %v1626, %v1622
        %v1687 = vpack.c.b16 %v1627, %v1623
        %v1688 = vpack.c.b16 %v1628, %v1624
        %v1689 = vpack.c.b16 %v1633, %v1629
        %v1690 = vpack.c.b16 %v1634, %v1630
        %v1691 = vpack.c.b16 %v1635, %v1631
        %v1692 = vpack.c.b16 %v1636, %v1632
        %v1693 = vpack.c.b16 %v1641, %v1637
        %v1694 = vpack.c.b16 %v1642, %v1638
        %v1695 = vpack.c.b16 %v1643, %v1639
        %v1696 = vpack.c.b16 %v1644, %v1640
        %v1697 = vpack.c.b16 %v1649, %v1645
        %v1698 = vpack.c.b16 %v1650, %v1646
        %v1699 = vpack.c.b16 %v1651, %v1647
        %v1700 = vpack.c.b16 %v1652, %v1648
        %v1701 = vpack.c.b16 %v1657, %v1653
        %v1702 = vpack.c.b16 %v1658, %v1654
        %v1703 = vpack.c.b16 %v1659, %v1655
        %v1704 = vpack.c.b16 %v1660, %v1656
        %v1705 = vpack.c.b16 %v1665, %v1661
        %v1706 = vpack.c.b16 %v1666, %v1662
        %v1707 = vpack.c.b16 %v1667, %v1663
        %v1708 = vpack.c.b16 %v1668, %v1664
        %v1709 = vpack.c.b16 %v1673, %v1669
        %v1710 = vpack.c.b16 %v1674, %v1670
        %v1711 = vpack.c.b16 %v1675, %v1671
        %v1712 = vpack.c.b16 %v1676, %v1672
        %v1713 = vpack.c.b16 %v1681, %v1677
        %v1714 = vpack.c.b16 %v1682, %v1678
        %v1715 = vpack.c.b16 %v1683, %v1679
        %v1716 = vpack.c.b16 %v1684, %v1680
        %1749 = vmatprep.subr.bf16.mxu0 %v1686
        %1750 = vmatpush1.bf16.msra.mxu0 %v1685
        %1751 = vmatprep.subr.bf16.mxu0 %v1690
        %1752 = vmatpush1.bf16.msra.mxu0 %v1689
        %1753 = vmatprep.subr.bf16.mxu0 %v1694
        %1754 = vmatpush1.bf16.msra.mxu0 %v1693
        %1755 = vmatprep.subr.bf16.mxu0 %v1698
        %1756 = vmatpush1.bf16.msra.mxu0 %v1697
        %1757 = vmatprep.subr.bf16.mxu0 %v1702
        %1758 = vmatpush1.bf16.msra.mxu0 %v1701
        %1759 = vmatprep.subr.bf16.mxu0 %v1706
        %1760 = vmatpush1.bf16.msra.mxu0 %v1705
        %1761 = vmatprep.subr.bf16.mxu0 %v1710
        %1762 = vmatpush1.bf16.msra.mxu0 %v1709
        %1763 = vmatprep.subr.bf16.mxu0 %v1714
        %1764 = vmatpush1.bf16.msra.mxu0 %v1713
        %1765 = vmatprep.subr.bf16.mxu0 0
        %1766 = vmatpush1.bf16.msra.mxu0 0
        %1767 = vmatprep.subr.bf16.mxu0 0
        %1768 = vmatpush1.bf16.msra.mxu0 0
        %1769 = vmatprep.subr.bf16.mxu0 0
        %1770 = vmatpush1.bf16.msra.mxu0 0
        %1771 = vmatprep.subr.bf16.mxu0 0
        %1772 = vmatpush1.bf16.msra.mxu0 0
        %1773 = vmatprep.subr.bf16.mxu0 0
        %1774 = vmatpush1.bf16.msra.mxu0 0
        %1775 = vmatprep.subr.bf16.mxu0 0
        %1776 = vmatpush1.bf16.msra.mxu0 0
        %1777 = vmatprep.subr.bf16.mxu0 0
        %1778 = vmatpush1.bf16.msra.mxu0 0
        %1779 = vmatprep.subr.bf16.mxu0 0
        %1780 = vmatpush1.bf16.msra.mxu0 0
        %1781 = vmatprep.mubr.bf16.mxu0 0
        %1782 = vmatmul.mubr.bf16.gmra.mrb[0].mxu0 %v1582
        %v1783 = vpop.f32.mrb[0].mxu0
        %v1784 = vadd.f32 0.0, %v1783
        %v1785 = vpop.f32.mrb[0].mxu0
        %v1786 = vadd.f32 0.0, %v1785
        %v1787 = vpop.f32.mrb[0].mxu0
        %v1788 = vpop.f32.mrb[0].mxu0
        %1789 = vdwg.mxu0
        %1790 = vmatprep.subr.bf16.mxu0 %v1688
        %1791 = vmatpush1.bf16.msra.mxu0 %v1687
        %1792 = vmatprep.subr.bf16.mxu0 %v1692
        %1793 = vmatpush1.bf16.msra.mxu0 %v1691
        %1794 = vmatprep.subr.bf16.mxu0 %v1696
        %1795 = vmatpush1.bf16.msra.mxu0 %v1695
        %1796 = vmatprep.subr.bf16.mxu0 %v1700
        %1797 = vmatpush1.bf16.msra.mxu0 %v1699
        %1798 = vmatprep.subr.bf16.mxu0 %v1704
        %1799 = vmatpush1.bf16.msra.mxu0 %v1703
        %1800 = vmatprep.subr.bf16.mxu0 %v1708
        %1801 = vmatpush1.bf16.msra.mxu0 %v1707
        %1802 = vmatprep.subr.bf16.mxu0 %v1712
        %1803 = vmatpush1.bf16.msra.mxu0 %v1711
        %1804 = vmatprep.subr.bf16.mxu0 %v1716
        %1805 = vmatpush1.bf16.msra.mxu0 %v1715
        %1806 = vmatprep.subr.bf16.mxu0 0
        %1807 = vmatpush1.bf16.msra.mxu0 0
        %1808 = vmatprep.subr.bf16.mxu0 0
        %1809 = vmatpush1.bf16.msra.mxu0 0
        %1810 = vmatprep.subr.bf16.mxu0 0
        %1811 = vmatpush1.bf16.msra.mxu0 0
        %1812 = vmatprep.subr.bf16.mxu0 0
        %1813 = vmatpush1.bf16.msra.mxu0 0
        %1814 = vmatprep.subr.bf16.mxu0 0
        %1815 = vmatpush1.bf16.msra.mxu0 0
        %1816 = vmatprep.subr.bf16.mxu0 0
        %1817 = vmatpush1.bf16.msra.mxu0 0
        %1818 = vmatprep.subr.bf16.mxu0 0
        %1819 = vmatpush1.bf16.msra.mxu0 0
        %1820 = vmatprep.subr.bf16.mxu0 0
        %1821 = vmatpush1.bf16.msra.mxu0 0
        %1822 = vmatprep.mubr.bf16.mxu0 0
        %1823 = vmatmul.mubr.bf16.gmra.mrb[0].mxu0 %v1582
        %v1824 = vpop.f32.mrb[0].mxu0
        %v1825 = vadd.f32 0.0, %v1824
        %v1826 = vpop.f32.mrb[0].mxu0
        %v1827 = vadd.f32 0.0, %v1826
        %v1828 = vpop.f32.mrb[0].mxu0
        %v1829 = vpop.f32.mrb[0].mxu0
        %1830 = vdwg.mxu0
        %v1831 = vadd.f32 %v1543, %v1784
        %v1832 = vadd.f32 %v1544, %v1786
        %v1833 = vadd.f32 %v1545, %v1825
        %v1834 = vadd.f32 %v1546, %v1827
        %1835 = vmatprep.subr.bf16.mxu0 %v1686
        %1836 = vmatpush1.bf16.msra.mxu0 %v1685
        %1837 = vmatprep.subr.bf16.mxu0 %v1690
        %1838 = vmatpush1.bf16.msra.mxu0 %v1689
        %1839 = vmatprep.subr.bf16.mxu0 %v1694
        %1840 = vmatpush1.bf16.msra.mxu0 %v1693
        %1841 = vmatprep.subr.bf16.mxu0 %v1698
        %1842 = vmatpush1.bf16.msra.mxu0 %v1697
        %1843 = vmatprep.subr.bf16.mxu0 %v1702
        %1844 = vmatpush1.bf16.msra.mxu0 %v1701
        %1845 = vmatprep.subr.bf16.mxu0 %v1706
        %1846 = vmatpush1.bf16.msra.mxu0 %v1705
        %1847 = vmatprep.subr.bf16.mxu0 %v1710
        %1848 = vmatpush1.bf16.msra.mxu0 %v1709
        %1849 = vmatprep.subr.bf16.mxu0 %v1714
        %1850 = vmatpush1.bf16.msra.mxu0 %v1713
        %1851 = vmatprep.subr.bf16.mxu0 0
        %1852 = vmatpush1.bf16.msra.mxu0 0
        %1853 = vmatprep.subr.bf16.mxu0 0
        %1854 = vmatpush1.bf16.msra.mxu0 0
        %1855 = vmatprep.subr.bf16.mxu0 0
        %1856 = vmatpush1.bf16.msra.mxu0 0
        %1857 = vmatprep.subr.bf16.mxu0 0
        %1858 = vmatpush1.bf16.msra.mxu0 0
        %1859 = vmatprep.subr.bf16.mxu0 0
        %1860 = vmatpush1.bf16.msra.mxu0 0
        %1861 = vmatprep.subr.bf16.mxu0 0
        %1862 = vmatpush1.bf16.msra.mxu0 0
        %1863 = vmatprep.subr.bf16.mxu0 0
        %1864 = vmatpush1.bf16.msra.mxu0 0
        %1865 = vmatprep.subr.bf16.mxu0 0
        %1866 = vmatpush1.bf16.msra.mxu0 0
        %1867 = vmatprep.mubr.bf16.mxu0 0
        %1868 = vmatmul.mubr.bf16.gmra.mrb[0].mxu0 %v1585
        %v1869 = vpop.f32.mrb[0].mxu0
        %v1870 = vadd.f32 0.0, %v1869
        %v1871 = vpop.f32.mrb[0].mxu0
        %v1872 = vadd.f32 0.0, %v1871
        %v1873 = vpop.f32.mrb[0].mxu0
        %v1874 = vpop.f32.mrb[0].mxu0
        %1875 = vdwg.mxu0
        %1876 = vmatprep.subr.bf16.mxu0 %v1688
        %1877 = vmatpush1.bf16.msra.mxu0 %v1687
        %1878 = vmatprep.subr.bf16.mxu0 %v1692
        %1879 = vmatpush1.bf16.msra.mxu0 %v1691
        %1880 = vmatprep.subr.bf16.mxu0 %v1696
        %1881 = vmatpush1.bf16.msra.mxu0 %v1695
        %1882 = vmatprep.subr.bf16.mxu0 %v1700
        %1883 = vmatpush1.bf16.msra.mxu0 %v1699
        %1884 = vmatprep.subr.bf16.mxu0 %v1704
        %1885 = vmatpush1.bf16.msra.mxu0 %v1703
        %1886 = vmatprep.subr.bf16.mxu0 %v1708
        %1887 = vmatpush1.bf16.msra.mxu0 %v1707
        %1888 = vmatprep.subr.bf16.mxu0 %v1712
        %1889 = vmatpush1.bf16.msra.mxu0 %v1711
        %1890 = vmatprep.subr.bf16.mxu0 %v1716
        %1891 = vmatpush1.bf16.msra.mxu0 %v1715
        %1892 = vmatprep.subr.bf16.mxu0 0
        %1893 = vmatpush1.bf16.msra.mxu0 0
        %1894 = vmatprep.subr.bf16.mxu0 0
        %1895 = vmatpush1.bf16.msra.mxu0 0
        %1896 = vmatprep.subr.bf16.mxu0 0
        %1897 = vmatpush1.bf16.msra.mxu0 0
        %1898 = vmatprep.subr.bf16.mxu0 0
        %1899 = vmatpush1.bf16.msra.mxu0 0
        %1900 = vmatprep.subr.bf16.mxu0 0
        %1901 = vmatpush1.bf16.msra.mxu0 0
        %1902 = vmatprep.subr.bf16.mxu0 0
        %1903 = vmatpush1.bf16.msra.mxu0 0
        %1904 = vmatprep.subr.bf16.mxu0 0
        %1905 = vmatpush1.bf16.msra.mxu0 0
        %1906 = vmatprep.subr.bf16.mxu0 0
        %1907 = vmatpush1.bf16.msra.mxu0 0
        %1908 = vmatprep.mubr.bf16.mxu0 0
        %1909 = vmatmul.mubr.bf16.gmra.mrb[0].mxu0 %v1585
        %v1910 = vpop.f32.mrb[0].mxu0
        %v1911 = vadd.f32 0.0, %v1910
        %v1912 = vpop.f32.mrb[0].mxu0
        %v1913 = vadd.f32 0.0, %v1912
        %v1914 = vpop.f32.mrb[0].mxu0
        %v1915 = vpop.f32.mrb[0].mxu0
        %1916 = vdwg.mxu0
        %v1917 = vadd.f32 %v1831, %v1870
        %v1918 = vadd.f32 %v1832, %v1872
        %v1919 = vadd.f32 %v1833, %v1911
        %v1920 = vadd.f32 %v1834, %v1913
        %1921 = vmatprep.subr.bf16.mxu0 %v1686
        %1922 = vmatpush1.bf16.msra.mxu0 %v1685
        %1923 = vmatprep.subr.bf16.mxu0 %v1690
        %1924 = vmatpush1.bf16.msra.mxu0 %v1689
        %1925 = vmatprep.subr.bf16.mxu0 %v1694
        %1926 = vmatpush1.bf16.msra.mxu0 %v1693
        %1927 = vmatprep.subr.bf16.mxu0 %v1698
        %1928 = vmatpush1.bf16.msra.mxu0 %v1697
        %1929 = vmatprep.subr.bf16.mxu0 %v1702
        %1930 = vmatpush1.bf16.msra.mxu0 %v1701
        %1931 = vmatprep.subr.bf16.mxu0 %v1706
        %1932 = vmatpush1.bf16.msra.mxu0 %v1705
        %1933 = vmatprep.subr.bf16.mxu0 %v1710
        %1934 = vmatpush1.bf16.msra.mxu0 %v1709
        %1935 = vmatprep.subr.bf16.mxu0 %v1714
        %1936 = vmatpush1.bf16.msra.mxu0 %v1713
        %1937 = vmatprep.subr.bf16.mxu0 0
        %1938 = vmatpush1.bf16.msra.mxu0 0
        %1939 = vmatprep.subr.bf16.mxu0 0
        %1940 = vmatpush1.bf16.msra.mxu0 0
        %1941 = vmatprep.subr.bf16.mxu0 0
        %1942 = vmatpush1.bf16.msra.mxu0 0
        %1943 = vmatprep.subr.bf16.mxu0 0
        %1944 = vmatpush1.bf16.msra.mxu0 0
        %1945 = vmatprep.subr.bf16.mxu0 0
        %1946 = vmatpush1.bf16.msra.mxu0 0
        %1947 = vmatprep.subr.bf16.mxu0 0
        %1948 = vmatpush1.bf16.msra.mxu0 0
        %1949 = vmatprep.subr.bf16.mxu0 0
        %1950 = vmatpush1.bf16.msra.mxu0 0
        %1951 = vmatprep.subr.bf16.mxu0 0
        %1952 = vmatpush1.bf16.msra.mxu0 0
        %1953 = vmatprep.mubr.bf16.mxu0 0
        %1954 = vmatmul.mubr.bf16.gmra.mrb[0].mxu0 %v1588
        %v1955 = vpop.f32.mrb[0].mxu0
        %v1956 = vadd.f32 0.0, %v1955
        %v1957 = vpop.f32.mrb[0].mxu0
        %v1958 = vadd.f32 0.0, %v1957
        %v1959 = vpop.f32.mrb[0].mxu0
        %v1960 = vpop.f32.mrb[0].mxu0
        %1961 = vdwg.mxu0
        %1962 = vmatprep.subr.bf16.mxu0 %v1688
        %1963 = vmatpush1.bf16.msra.mxu0 %v1687
        %1964 = vmatprep.subr.bf16.mxu0 %v1692
        %1965 = vmatpush1.bf16.msra.mxu0 %v1691
        %1966 = vmatprep.subr.bf16.mxu0 %v1696
        %1967 = vmatpush1.bf16.msra.mxu0 %v1695
        %1968 = vmatprep.subr.bf16.mxu0 %v1700
        %1969 = vmatpush1.bf16.msra.mxu0 %v1699
        %1970 = vmatprep.subr.bf16.mxu0 %v1704
        %1971 = vmatpush1.bf16.msra.mxu0 %v1703
        %1972 = vmatprep.subr.bf16.mxu0 %v1708
        %1973 = vmatpush1.bf16.msra.mxu0 %v1707
        %1974 = vmatprep.subr.bf16.mxu0 %v1712
        %1975 = vmatpush1.bf16.msra.mxu0 %v1711
        %1976 = vmatprep.subr.bf16.mxu0 %v1716
        %1977 = vmatpush1.bf16.msra.mxu0 %v1715
        %1978 = vmatprep.subr.bf16.mxu0 0
        %1979 = vmatpush1.bf16.msra.mxu0 0
        %1980 = vmatprep.subr.bf16.mxu0 0
        %1981 = vmatpush1.bf16.msra.mxu0 0
        %1982 = vmatprep.subr.bf16.mxu0 0
        %1983 = vmatpush1.bf16.msra.mxu0 0
        %1984 = vmatprep.subr.bf16.mxu0 0
        %1985 = vmatpush1.bf16.msra.mxu0 0
        %1986 = vmatprep.subr.bf16.mxu0 0
        %1987 = vmatpush1.bf16.msra.mxu0 0
        %1988 = vmatprep.subr.bf16.mxu0 0
        %1989 = vmatpush1.bf16.msra.mxu0 0
        %1990 = vmatprep.subr.bf16.mxu0 0
        %1991 = vmatpush1.bf16.msra.mxu0 0
        %1992 = vmatprep.subr.bf16.mxu0 0
        %1993 = vmatpush1.bf16.msra.mxu0 0
        %1994 = vmatprep.mubr.bf16.mxu0 0
        %1995 = vmatmul.mubr.bf16.gmra.mrb[0].mxu0 %v1588
        %v1996 = vpop.f32.mrb[0].mxu0
        %v1997 = vadd.f32 0.0, %v1996
        %v1998 = vpop.f32.mrb[0].mxu0
        %v1999 = vadd.f32 0.0, %v1998
        %v2000 = vpop.f32.mrb[0].mxu0
        %v2001 = vpop.f32.mrb[0].mxu0
        %2002 = vdwg.mxu0
        %v2003 = vadd.f32 %v1917, %v1956
        %v2004 = vadd.f32 %v1918, %v1958
        %v2005 = vadd.f32 %v1919, %v1997
        %v2006 = vadd.f32 %v1920, %v1999
        %2007 = vst [vmem:[%s175] sm:$0xff] %v2003
        %2008 = vst [vmem:[%s175 + $0x8] sm:$0xff] %v2004
        %2009 = vst [vmem:[%s175 + $0x10] sm:$0xff] %v2005
        %2010 = vst [vmem:[%s175 + $0x18] sm:$0xff] %v2006
        %s2011 = sand.u32 %s75, 1
        %s2012 = scalar_lea.sflag [#allocation4], %s2011
        %s2013 = sand.u32 %s75, 1
        %s2014 = smul.addr %s2013, 32
        %s2015 = scalar_lea.vmem [#allocation7], %s2014
        // Predicated region
        $region37: #{tpu_custom_call.1} parent=27 // pred_check
          %p2016 = pneg %p85
        $region38: #{tpu_custom_call.1} parent=27 // pred_check_branch
          %2018 = sbr.rel (%p2016) target = $region40
        $region39: #{tpu_custom_call.1} parent=27 // pred_region
          %s2020 = ssub.s32 512, 512
          %2021 = vsyncadd %s2012, %s2020
          %s2022 = smul.addr %s20, 4
          %s2023 = smul.addr %s2022, 128
          %s2024 = scalar_lea.hbm %s2, %s2023
          %s2026 = sshll.u32 %s2015, 4
          %s2027 = int_to_ptr.vmem [resolvable:$true] %s2026
          %2029 = dma.vmem_to_hbm [thread:$0]  %s2027, 512, %s2024, %s2012
        $region40: #{tpu_custom_call.1} parent=27 // pred_fallthru
          _
      $region28: #{tpu_custom_call.1} parent=5 // pred_fallthru
        _
      %p2030 = scmp.le.s32.totalorder 2, %s15
      // Predicated region
      $region41: #{tpu_custom_call.1} parent=5 // pred_check
        %p2031 = pneg %p2030
      $region42: #{tpu_custom_call.1} parent=5 // pred_check_branch
        %2033 = sbr.rel (%p2031) target = $region44
      $region43: #{tpu_custom_call.1} parent=5 // pred_region
        %s2034 = ssub.s32 %s15, 2
        // Predicated region
        $region45: #{tpu_custom_call.1} parent=43 // pred_check
          %p2035 = pneg %p91
        $region46: #{tpu_custom_call.1} parent=43 // pred_check_branch
          %2037 = sbr.rel (%p2035) target = $region48
        $region47: #{tpu_custom_call.1} parent=43 // pred_region
          %s2038 = sand.u32 %s76, 1
          %s2039 = scalar_lea.sflag [#allocation4], %s2038
          %s2040 = sand.u32 %s76, 1
          %s2041 = smul.addr %s2040, 32
          %s2042 = scalar_lea.vmem [#allocation7], %s2041
          %2043 = dma.done %s2039, 512
        $region48: #{tpu_custom_call.1} parent=43 // pred_fallthru
          _
      $region44: #{tpu_custom_call.1} parent=5 // pred_fallthru
        _
    $region6: #{tpu_custom_call.1} parent=1 // loop_footer
      %s19 = sadd.s32 1, %s15
    $region7: #{tpu_custom_call.1} parent=1 // loop_footer_branch
      %14 = sbr.rel target = $region3
    $region8: #{tpu_custom_call.1} parent=1 // loop_exit
      _
    %2044 = vsyncpa [#allocation3], 1
    %s2045 = scalar_lea.sflag [#allocation3], 1
    %2046 = vsyncpa %s2045, 1
    %2047 = vsyncpa [#allocation6], 1
    %2048 = vsyncpa [#allocation4], 1
    %s2049 = scalar_lea.sflag [#allocation4], 1
    %2050 = vsyncpa %s2049, 1

</llo_original>
